<compile_context>
chip_gen: v5e
topology: v5e:2x2
jax: 0.10.0
libtpu: 0.0.40
codegen_flags: <defaults>
</compile_context>

<pallas_src>
import numpy as np
import jax
import jax.numpy as jnp
from jax.experimental import pallas as pl
from jax.experimental.pallas import tpu as pltpu

_LANE = 128  # feature-dim padding unit (lane-aligned, MXU-friendly on v5e/v6e/v7x)


def _round_up(x: int, m: int) -> int:
    return ((x + m - 1) // m) * m


# -----------------------------------------------------------------------------
# Fused whole-network kernel.
#   h = clamp(x + noise_scale * noise, 0, 1)        (training only, fused)
#   for every layer l:  y_l = act_l(h @ W_l^T + b_l);  out_l <- y_l;  h = y_l
# All weights/biases are VMEM-resident; the layer loop is unrolled at trace time.
# -----------------------------------------------------------------------------
def _make_dae_kernel(acts, add_noise: bool, noise_scale: float):
    n_layers = len(acts)

    def kernel(*refs):
        idx = 0
        x_ref = refs[idx]; idx += 1
        noise_ref = None
        if add_noise:
            noise_ref = refs[idx]; idx += 1
        wb_refs = refs[idx: idx + 2 * n_layers]
        out_refs = refs[idx + 2 * n_layers:]

        h = x_ref[...].astype(jnp.float32)
        if add_noise:
            # DAE.add_noise fused: noise tensor is zero in padded rows/cols, so
            # padded entries stay exactly 0 after the clamp.
            h = jnp.clip(h + jnp.float32(noise_scale) * noise_ref[...].astype(jnp.float32),
                         0.0, 1.0)

        for l in range(n_layers):
            w = wb_refs[2 * l][...]        # (Kp, Np) bf16, VMEM-resident
            b = wb_refs[2 * l + 1][...]    # (1, Np)  f32
            # bf16 MXU inputs, f32 accumulation.
            y = jnp.dot(h.astype(jnp.bfloat16), w,
                        preferred_element_type=jnp.float32) + b
            act = acts[l]
            if act == "relu":
                y = jnp.maximum(y, 0.0)
            elif act == "sigmoid":
                y = 1.0 / (1.0 + jnp.exp(-y))
            out_refs[l][...] = y.astype(out_refs[l].dtype)
            h = y

    return kernel


# -----------------------------------------------------------------------------
# Parameter preparation: padded bf16 W^T (Kp, Np) and padded f32 bias (1, Np).
# Padded weight rows/cols and padded bias entries are zero, so padded input
# columns contribute nothing and padded output columns are exactly zero
# (pre-activation) -- relied upon for the latent layer.
# -----------------------------------------------------------------------------
def _prep_layer(key, fan_in: int, fan_out: int, act: str):
    kw, kb = jax.random.split(key)
    bound = 1.0 / float(np.sqrt(fan_in))
    w = jax.random.uniform(kw, (fan_out, fan_in), jnp.float32, -bound, bound)
    b = jax.random.uniform(kb, (fan_out,), jnp.float32, -bound, bound)
    kp = _round_up(fan_in, _LANE)
    npad = _round_up(fan_out, _LANE)
    w_t = jnp.zeros((kp, npad), jnp.float32).at[:fan_in, :fan_out].set(w.T)
    b_p = jnp.zeros((1, npad), jnp.float32).at[0, :fan_out].set(b)
    return dict(w_t=w_t.astype(jnp.bfloat16), b=b_p, w_raw=w, b_raw=b,
                act=act, in_dim=fan_in, out_dim=fan_out, kp=kp, npad=npad)


def init_dae(key, *, width=256, depth=1, latent_size=10,
             img_size=(1, 28, 28), noise_scale=0.2):
    d = int(np.prod(img_size))
    dims = [(d, width)] + [(width, width)] * (depth - 1) + [(width, latent_size)]
    acts = ["relu"] * depth + ["none"]                       # encoder
    dims += [(latent_size, width)] + [(width, width)] * (depth - 1) + [(width, d)]
    acts += ["relu"] * depth + ["sigmoid"]                   # decoder
    layers = []
    for (fi, fo), act in zip(dims, acts):
        key, sub = jax.random.split(key)
        layers.append(_prep_layer(sub, fi, fo, act))
    return dict(layers=layers, acts=tuple(acts), n_enc=depth + 1,
                img_size=tuple(int(s) for s in img_size),
                noise_scale=float(noise_scale))


# -----------------------------------------------------------------------------
# DAE forward (matches PyTorch DAE.forward: A = a_enc + a_dec, plus z, x_hat).
# -----------------------------------------------------------------------------
def dae_forward(model, x, *, training=False, rng=None):
    layers = model["layers"]
    acts = model["acts"]
    img_size = model["img_size"]
    n_enc = model["n_enc"]
    B = int(x.shape[0])
    D = int(np.prod(img_size))
    Dp = layers[0]["kp"]

    # Batch tiling.  tm capped at 128 (safe on v5e; raise to 256 on v6e/v7x for
    # large training batches if desired).
    if B <= 128:
        Bp = _round_up(B, 8)
        tm = Bp
    else:
        Bp = _round_up(B, 128)
        tm = 128
    nb = Bp // tm

    h0 = x.reshape(B, D).astype(jnp.float32)
    h0 = jnp.pad(h0, ((0, Bp - B), (0, Dp - D)))

    inputs = [h0]
    in_specs = [pl.BlockSpec((tm, Dp), lambda i: (i, 0))]

    add_noise = bool(training)
    if add_noise:
        if rng is None:
            rng = jax.random.PRNGKey(0)
        # torch.normal(0, 1, x.shape) equivalent, generated host-side (no
        # in-kernel HW PRNG needed); padded region is exactly zero.
        noise = jax.random.normal(rng, (B, D), jnp.float32)
        noise = jnp.pad(noise, ((0, Bp - B), (0, Dp - D)))
        inputs.append(noise)
        in_specs.append(pl.BlockSpec((tm, Dp), lambda i: (i, 0)))

    out_shapes = []
    out_specs = []
    for layer in layers:
        kp, npad = layer["kp"], layer["npad"]
        inputs += [layer["w_t"], layer["b"]]
        # Weight/bias index maps ignore the batch index -> VMEM-resident.
        in_specs += [pl.BlockSpec((kp, npad), lambda i: (0, 0)),
                     pl.BlockSpec((1, npad), lambda i: (0, 0))]
        out_shapes.append(jax.ShapeDtypeStruct((Bp, npad), jnp.float32))
        out_specs.append(pl.BlockSpec((tm, npad), lambda i: (i, 0)))

    kernel = _make_dae_kernel(acts, add_noise, model["noise_scale"])

    outs = pl.pallas_call(
        kernel,
        out_shape=tuple(out_shapes),
        grid=(nb,),
        in_specs=in_specs,
        out_specs=tuple(out_specs),
        compiler_params=pltpu.CompilerParams(
            dimension_semantics=("parallel",)),
    )(*inputs)

    A = []
    z = None
    x_hat = None
    for l, (layer, o) in enumerate(zip(layers, outs)):
        o = o[:B, :layer["out_dim"]]
        if layer["act"] == "relu":
            A.append(o)
        if l == n_enc - 1:
            z = o
        if l == len(layers) - 1:
            x_hat = o.reshape((B,) + tuple(img_size))
    return dict(x_hat=x_hat, A=A, z=z)


# -----------------------------------------------------------------------------
# Pure-JAX reference (same bf16-input / f32-accumulate math).
# -----------------------------------------------------------------------------
def ref_forward(model, x):
    layers = model["layers"]
    n_enc = model["n_enc"]
    img_size = model["img_size"]
    B = int(x.shape[0])
    D = int(np.prod(img_size))
    h = x.reshape(B, D).astype(jnp.float32)

    A = []
    z = None
    for l, layer in enumerate(layers):
        y = jnp.dot(h.astype(jnp.bfloat16),
                    layer["w_raw"].T.astype(jnp.bfloat16),
                    preferred_element_type=jnp.float32) + layer["b_raw"]
        if layer["act"] == "relu":
            y = jnp.maximum(y, 0.0)
            A.append(y)
        elif layer["act"] == "sigmoid":
            y = 1.0 / (1.0 + jnp.exp(-y))
        if l == n_enc - 1:
            z = y
        h = y
    x_hat = h.reshape((B,) + tuple(img_size))
    return dict(x_hat=x_hat, A=A, z=z)


if __name__ == "__main__":
    key = jax.random.PRNGKey(0)
    key, pkey, xkey, nkey = jax.random.split(key, 4)

    img_size = (1, 28, 28)
    B = 4
    model = init_dae(pkey, width=128, depth=2, latent_size=10,
                     img_size=img_size, noise_scale=0.2)
    x = jax.random.uniform(xkey, (B,) + img_size, jnp.float32, 0.0, 1.0)

    # Eval mode (no noise): must match the pure-JAX reference.
    out = dae_forward(model, x, training=False)
    out = jax.block_until_ready(out)
    ref = ref_forward(model, x)

    np.testing.assert_allclose(np.asarray(out["x_hat"]), np.asarray(ref["x_hat"]),
                               atol=2e-3, rtol=2e-3)
    np.testing.assert_allclose(np.asarray(out["z"]), np.asarray(ref["z"]),
                               atol=2e-3, rtol=2e-3)
    assert len(out["A"]) == len(ref["A"])
    for a_k, a_r in zip(out["A"], ref["A"]):
        np.testing.assert_allclose(np.asarray(a_k), np.asarray(a_r),
                                   atol=2e-3, rtol=2e-3)

    # Training mode: noise add + clamp fused into the kernel; compare against
    # the reference run on the identically-noised input.
    out_tr = dae_forward(model, x, training=True, rng=nkey)
    out_tr = jax.block_until_ready(out_tr)
    D = int(np.prod(img_size))
    noise = jax.random.normal(nkey, (B, D), jnp.float32)
    x_noisy = jnp.clip(x.reshape(B, D) + model["noise_scale"] * noise, 0.0, 1.0)
    ref_tr = ref_forward(model, x_noisy.reshape((B,) + img_size))
    np.testing.assert_allclose(np.asarray(out_tr["x_hat"]), np.asarray(ref_tr["x_hat"]),
                               atol=2e-3, rtol=2e-3)
    assert out_tr["x_hat"].shape == (B,) + img_size
    assert bool(jnp.all((out_tr["x_hat"] >= 0.0) & (out_tr["x_hat"] <= 1.0)))

    print("KERNEL_OK")
</pallas_src>

<mosaic_0001>
module attributes {stable_mosaic.version = 11 : i64} {
  func.func @kernel(%arg0: i32, %arg1: memref<8x896xf32, #tpu.memory_space<vmem>>, %arg2: memref<896x128xbf16, #tpu.memory_space<vmem>>, %arg3: memref<1x128xf32, #tpu.memory_space<vmem>>, %arg4: memref<128x128xbf16, #tpu.memory_space<vmem>>, %arg5: memref<1x128xf32, #tpu.memory_space<vmem>>, %arg6: memref<128x128xbf16, #tpu.memory_space<vmem>>, %arg7: memref<1x128xf32, #tpu.memory_space<vmem>>, %arg8: memref<128x128xbf16, #tpu.memory_space<vmem>>, %arg9: memref<1x128xf32, #tpu.memory_space<vmem>>, %arg10: memref<128x128xbf16, #tpu.memory_space<vmem>>, %arg11: memref<1x128xf32, #tpu.memory_space<vmem>>, %arg12: memref<128x896xbf16, #tpu.memory_space<vmem>>, %arg13: memref<1x896xf32, #tpu.memory_space<vmem>>, %arg14: memref<8x128xf32, #tpu.memory_space<vmem>>, %arg15: memref<8x128xf32, #tpu.memory_space<vmem>>, %arg16: memref<8x128xf32, #tpu.memory_space<vmem>>, %arg17: memref<8x128xf32, #tpu.memory_space<vmem>>, %arg18: memref<8x128xf32, #tpu.memory_space<vmem>>, %arg19: memref<8x896xf32, #tpu.memory_space<vmem>>) attributes {dimension_semantics = [#tpu.dimension_semantics<parallel>], iteration_bounds = array<i64: 1>, scalar_prefetch = 0 : i64, scratch_operands = 0 : i64, tpu.core_type = #tpu.core_type<tc>, window_params = [{transform_indices = @transform_0, window_bounds = array<i64: 8, 896>}, {pipeline_mode = #tpu.pipeline_mode<synchronous>, transform_indices = @transform_1, window_bounds = array<i64: 896, 128>}, {pipeline_mode = #tpu.pipeline_mode<synchronous>, transform_indices = @transform_2, window_bounds = array<i64: 1, 128>}, {pipeline_mode = #tpu.pipeline_mode<synchronous>, transform_indices = @transform_3, window_bounds = array<i64: 128, 128>}, {pipeline_mode = #tpu.pipeline_mode<synchronous>, transform_indices = @transform_4, window_bounds = array<i64: 1, 128>}, {pipeline_mode = #tpu.pipeline_mode<synchronous>, transform_indices = @transform_5, window_bounds = array<i64: 128, 128>}, {pipeline_mode = #tpu.pipeline_mode<synchronous>, transform_indices = @transform_6, window_bounds = array<i64: 1, 128>}, {pipeline_mode = #tpu.pipeline_mode<synchronous>, transform_indices = @transform_7, window_bounds = array<i64: 128, 128>}, {pipeline_mode = #tpu.pipeline_mode<synchronous>, transform_indices = @transform_8, window_bounds = array<i64: 1, 128>}, {pipeline_mode = #tpu.pipeline_mode<synchronous>, transform_indices = @transform_9, window_bounds = array<i64: 128, 128>}, {pipeline_mode = #tpu.pipeline_mode<synchronous>, transform_indices = @transform_10, window_bounds = array<i64: 1, 128>}, {pipeline_mode = #tpu.pipeline_mode<synchronous>, transform_indices = @transform_11, window_bounds = array<i64: 128, 896>}, {pipeline_mode = #tpu.pipeline_mode<synchronous>, transform_indices = @transform_12, window_bounds = array<i64: 1, 896>}, {transform_indices = @transform_13, window_bounds = array<i64: 8, 128>}, {transform_indices = @transform_14, window_bounds = array<i64: 8, 128>}, {transform_indices = @transform_15, window_bounds = array<i64: 8, 128>}, {transform_indices = @transform_16, window_bounds = array<i64: 8, 128>}, {transform_indices = @transform_17, window_bounds = array<i64: 8, 128>}, {transform_indices = @transform_18, window_bounds = array<i64: 8, 896>}]} {
    %c0 = arith.constant 0 : index
    %c0_0 = arith.constant 0 : index
    %0 = vector.load %arg1[%c0, %c0_0] : memref<8x896xf32, #tpu.memory_space<vmem>>, vector<8x896xf32>
    %c0_1 = arith.constant 0 : index
    %c0_2 = arith.constant 0 : index
    %1 = vector.load %arg2[%c0_1, %c0_2] : memref<896x128xbf16, #tpu.memory_space<vmem>>, vector<896x128xbf16>
    %c0_3 = arith.constant 0 : index
    %c0_4 = arith.constant 0 : index
    %2 = vector.load %arg3[%c0_3, %c0_4] : memref<1x128xf32, #tpu.memory_space<vmem>>, vector<1x128xf32>
    %3 = arith.truncf %0 : vector<8x896xf32> to vector<8x896xbf16>
    %cst = arith.constant dense<0.000000e+00> : vector<8x128xf32>
    %4 = tpu.matmul %3, %1, %cst {dimension_numbers = #tpu.dot_dimension_numbers<[1], [0], [0], [1], [0, 0, 1, 1], [], []>} : vector<8x896xbf16>, vector<896x128xbf16>, vector<8x128xf32> -> vector<8x128xf32>
    %5 = vector.broadcast %2 : vector<1x128xf32> to vector<8x128xf32>
    %6 = arith.addf %4, %5 : vector<8x128xf32>
    %cst_5 = arith.constant 0.000000e+00 : f32
    %7 = vector.broadcast %cst_5 : f32 to vector<8x128xf32>
    %8 = arith.maximumf %6, %7 : vector<8x128xf32>
    %c0_6 = arith.constant 0 : index
    %c0_7 = arith.constant 0 : index
    %9 = vector.load %arg14[%c0_6, %c0_7] : memref<8x128xf32, #tpu.memory_space<vmem>>, vector<8x128xf32>
    tpu.vector_store %arg14[%c0_6, %c0_7], %8 {strides = array<i32>} : memref<8x128xf32, #tpu.memory_space<vmem>>, vector<8x128xf32>,
    %c0_8 = arith.constant 0 : index
    %c0_9 = arith.constant 0 : index
    %10 = vector.load %arg4[%c0_8, %c0_9] : memref<128x128xbf16, #tpu.memory_space<vmem>>, vector<128x128xbf16>
    %c0_10 = arith.constant 0 : index
    %c0_11 = arith.constant 0 : index
    %11 = vector.load %arg5[%c0_10, %c0_11] : memref<1x128xf32, #tpu.memory_space<vmem>>, vector<1x128xf32>
    %12 = arith.truncf %8 : vector<8x128xf32> to vector<8x128xbf16>
    %cst_12 = arith.constant dense<0.000000e+00> : vector<8x128xf32>
    %13 = tpu.matmul %12, %10, %cst_12 {dimension_numbers = #tpu.dot_dimension_numbers<[1], [0], [0], [1], [0, 0, 1, 1], [], []>} : vector<8x128xbf16>, vector<128x128xbf16>, vector<8x128xf32> -> vector<8x128xf32>
    %14 = vector.broadcast %11 : vector<1x128xf32> to vector<8x128xf32>
    %15 = arith.addf %13, %14 : vector<8x128xf32>
    %cst_13 = arith.constant 0.000000e+00 : f32
    %16 = vector.broadcast %cst_13 : f32 to vector<8x128xf32>
    %17 = arith.maximumf %15, %16 : vector<8x128xf32>
    %c0_14 = arith.constant 0 : index
    %c0_15 = arith.constant 0 : index
    %18 = vector.load %arg15[%c0_14, %c0_15] : memref<8x128xf32, #tpu.memory_space<vmem>>, vector<8x128xf32>
    tpu.vector_store %arg15[%c0_14, %c0_15], %17 {strides = array<i32>} : memref<8x128xf32, #tpu.memory_space<vmem>>, vector<8x128xf32>,
    %c0_16 = arith.constant 0 : index
    %c0_17 = arith.constant 0 : index
    %19 = vector.load %arg6[%c0_16, %c0_17] : memref<128x128xbf16, #tpu.memory_space<vmem>>, vector<128x128xbf16>
    %c0_18 = arith.constant 0 : index
    %c0_19 = arith.constant 0 : index
    %20 = vector.load %arg7[%c0_18, %c0_19] : memref<1x128xf32, #tpu.memory_space<vmem>>, vector<1x128xf32>
    %21 = arith.truncf %17 : vector<8x128xf32> to vector<8x128xbf16>
    %cst_20 = arith.constant dense<0.000000e+00> : vector<8x128xf32>
    %22 = tpu.matmul %21, %19, %cst_20 {dimension_numbers = #tpu.dot_dimension_numbers<[1], [0], [0], [1], [0, 0, 1, 1], [], []>} : vector<8x128xbf16>, vector<128x128xbf16>, vector<8x128xf32> -> vector<8x128xf32>
    %23 = vector.broadcast %20 : vector<1x128xf32> to vector<8x128xf32>
    %24 = arith.addf %22, %23 : vector<8x128xf32>
    %c0_21 = arith.constant 0 : index
    %c0_22 = arith.constant 0 : index
    %25 = vector.load %arg16[%c0_21, %c0_22] : memref<8x128xf32, #tpu.memory_space<vmem>>, vector<8x128xf32>
    tpu.vector_store %arg16[%c0_21, %c0_22], %24 {strides = array<i32>} : memref<8x128xf32, #tpu.memory_space<vmem>>, vector<8x128xf32>,
    %c0_23 = arith.constant 0 : index
    %c0_24 = arith.constant 0 : index
    %26 = vector.load %arg8[%c0_23, %c0_24] : memref<128x128xbf16, #tpu.memory_space<vmem>>, vector<128x128xbf16>
    %c0_25 = arith.constant 0 : index
    %c0_26 = arith.constant 0 : index
    %27 = vector.load %arg9[%c0_25, %c0_26] : memref<1x128xf32, #tpu.memory_space<vmem>>, vector<1x128xf32>
    %28 = arith.truncf %24 : vector<8x128xf32> to vector<8x128xbf16>
    %cst_27 = arith.constant dense<0.000000e+00> : vector<8x128xf32>
    %29 = tpu.matmul %28, %26, %cst_27 {dimension_numbers = #tpu.dot_dimension_numbers<[1], [0], [0], [1], [0, 0, 1, 1], [], []>} : vector<8x128xbf16>, vector<128x128xbf16>, vector<8x128xf32> -> vector<8x128xf32>
    %30 = vector.broadcast %27 : vector<1x128xf32> to vector<8x128xf32>
    %31 = arith.addf %29, %30 : vector<8x128xf32>
    %cst_28 = arith.constant 0.000000e+00 : f32
    %32 = vector.broadcast %cst_28 : f32 to vector<8x128xf32>
    %33 = arith.maximumf %31, %32 : vector<8x128xf32>
    %c0_29 = arith.constant 0 : index
    %c0_30 = arith.constant 0 : index
    %34 = vector.load %arg17[%c0_29, %c0_30] : memref<8x128xf32, #tpu.memory_space<vmem>>, vector<8x128xf32>
    tpu.vector_store %arg17[%c0_29, %c0_30], %33 {strides = array<i32>} : memref<8x128xf32, #tpu.memory_space<vmem>>, vector<8x128xf32>,
    %c0_31 = arith.constant 0 : index
    %c0_32 = arith.constant 0 : index
    %35 = vector.load %arg10[%c0_31, %c0_32] : memref<128x128xbf16, #tpu.memory_space<vmem>>, vector<128x128xbf16>
    %c0_33 = arith.constant 0 : index
    %c0_34 = arith.constant 0 : index
    %36 = vector.load %arg11[%c0_33, %c0_34] : memref<1x128xf32, #tpu.memory_space<vmem>>, vector<1x128xf32>
    %37 = arith.truncf %33 : vector<8x128xf32> to vector<8x128xbf16>
    %cst_35 = arith.constant dense<0.000000e+00> : vector<8x128xf32>
    %38 = tpu.matmul %37, %35, %cst_35 {dimension_numbers = #tpu.dot_dimension_numbers<[1], [0], [0], [1], [0, 0, 1, 1], [], []>} : vector<8x128xbf16>, vector<128x128xbf16>, vector<8x128xf32> -> vector<8x128xf32>
    %39 = vector.broadcast %36 : vector<1x128xf32> to vector<8x128xf32>
    %40 = arith.addf %38, %39 : vector<8x128xf32>
    %cst_36 = arith.constant 0.000000e+00 : f32
    %41 = vector.broadcast %cst_36 : f32 to vector<8x128xf32>
    %42 = arith.maximumf %40, %41 : vector<8x128xf32>
    %c0_37 = arith.constant 0 : index
    %c0_38 = arith.constant 0 : index
    %43 = vector.load %arg18[%c0_37, %c0_38] : memref<8x128xf32, #tpu.memory_space<vmem>>, vector<8x128xf32>
    tpu.vector_store %arg18[%c0_37, %c0_38], %42 {strides = array<i32>} : memref<8x128xf32, #tpu.memory_space<vmem>>, vector<8x128xf32>,
    %c0_39 = arith.constant 0 : index
    %c0_40 = arith.constant 0 : index
    %44 = vector.load %arg12[%c0_39, %c0_40] : memref<128x896xbf16, #tpu.memory_space<vmem>>, vector<128x896xbf16>
    %c0_41 = arith.constant 0 : index
    %c0_42 = arith.constant 0 : index
    %45 = vector.load %arg13[%c0_41, %c0_42] : memref<1x896xf32, #tpu.memory_space<vmem>>, vector<1x896xf32>
    %46 = arith.truncf %42 : vector<8x128xf32> to vector<8x128xbf16>
    %cst_43 = arith.constant dense<0.000000e+00> : vector<8x896xf32>
    %47 = tpu.matmul %46, %44, %cst_43 {dimension_numbers = #tpu.dot_dimension_numbers<[1], [0], [0], [1], [0, 0, 1, 1], [], []>} : vector<8x128xbf16>, vector<128x896xbf16>, vector<8x896xf32> -> vector<8x896xf32>
    %48 = vector.broadcast %45 : vector<1x896xf32> to vector<8x896xf32>
    %49 = arith.addf %47, %48 : vector<8x896xf32>
    %cst_44 = arith.constant 0.000000e+00 : f32
    %50 = vector.broadcast %cst_44 : f32 to vector<8x896xf32>
    %51 = arith.subf %50, %49 : vector<8x896xf32>
    %52 = math.exp %51 : vector<8x896xf32>
    %cst_45 = arith.constant 1.000000e+00 : f32
    %53 = vector.broadcast %cst_45 : f32 to vector<8x896xf32>
    %54 = arith.addf %53, %52 : vector<8x896xf32>
    %cst_46 = arith.constant 1.000000e+00 : f32
    %55 = vector.broadcast %cst_46 : f32 to vector<8x896xf32>
    %56 = arith.divf %55, %54 : vector<8x896xf32>
    %c0_47 = arith.constant 0 : index
    %c0_48 = arith.constant 0 : index
    %57 = vector.load %arg19[%c0_47, %c0_48] : memref<8x896xf32, #tpu.memory_space<vmem>>, vector<8x896xf32>
    tpu.vector_store %arg19[%c0_47, %c0_48], %56 {strides = array<i32>} : memref<8x896xf32, #tpu.memory_space<vmem>>, vector<8x896xf32>,
    return
  }
  func.func @transform_0(%arg0: i32) -> (i32, i32) {
    %c0_i32 = arith.constant 0 : i32
    %c0_i32_0 = arith.constant 0 : i32
    return %arg0, %c0_i32 : i32, i32
  }
  func.func @transform_1(%arg0: i32) -> (i32, i32) {
    %c0_i32 = arith.constant 0 : i32
    %c0_i32_0 = arith.constant 0 : i32
    %c0_i32_1 = arith.constant 0 : i32
    return %c0_i32, %c0_i32_0 : i32, i32
  }
  func.func @transform_2(%arg0: i32) -> (i32, i32) {
    %c0_i32 = arith.constant 0 : i32
    %c0_i32_0 = arith.constant 0 : i32
    %c0_i32_1 = arith.constant 0 : i32
    return %c0_i32, %c0_i32_0 : i32, i32
  }
  func.func @transform_3(%arg0: i32) -> (i32, i32) {
    %c0_i32 = arith.constant 0 : i32
    %c0_i32_0 = arith.constant 0 : i32
    %c0_i32_1 = arith.constant 0 : i32
    return %c0_i32, %c0_i32_0 : i32, i32
  }
  func.func @transform_4(%arg0: i32) -> (i32, i32) {
    %c0_i32 = arith.constant 0 : i32
    %c0_i32_0 = arith.constant 0 : i32
    %c0_i32_1 = arith.constant 0 : i32
    return %c0_i32, %c0_i32_0 : i32, i32
  }
  func.func @transform_5(%arg0: i32) -> (i32, i32) {
    %c0_i32 = arith.constant 0 : i32
    %c0_i32_0 = arith.constant 0 : i32
    %c0_i32_1 = arith.constant 0 : i32
    return %c0_i32, %c0_i32_0 : i32, i32
  }
  func.func @transform_6(%arg0: i32) -> (i32, i32) {
    %c0_i32 = arith.constant 0 : i32
    %c0_i32_0 = arith.constant 0 : i32
    %c0_i32_1 = arith.constant 0 : i32
    return %c0_i32, %c0_i32_0 : i32, i32
  }
  func.func @transform_7(%arg0: i32) -> (i32, i32) {
    %c0_i32 = arith.constant 0 : i32
    %c0_i32_0 = arith.constant 0 : i32
    %c0_i32_1 = arith.constant 0 : i32
    return %c0_i32, %c0_i32_0 : i32, i32
  }
  func.func @transform_8(%arg0: i32) -> (i32, i32) {
    %c0_i32 = arith.constant 0 : i32
    %c0_i32_0 = arith.constant 0 : i32
    %c0_i32_1 = arith.constant 0 : i32
    return %c0_i32, %c0_i32_0 : i32, i32
  }
  func.func @transform_9(%arg0: i32) -> (i32, i32) {
    %c0_i32 = arith.constant 0 : i32
    %c0_i32_0 = arith.constant 0 : i32
    %c0_i32_1 = arith.constant 0 : i32
    return %c0_i32, %c0_i32_0 : i32, i32
  }
  func.func @transform_10(%arg0: i32) -> (i32, i32) {
    %c0_i32 = arith.constant 0 : i32
    %c0_i32_0 = arith.constant 0 : i32
    %c0_i32_1 = arith.constant 0 : i32
    return %c0_i32, %c0_i32_0 : i32, i32
  }
  func.func @transform_11(%arg0: i32) -> (i32, i32) {
    %c0_i32 = arith.constant 0 : i32
    %c0_i32_0 = arith.constant 0 : i32
    %c0_i32_1 = arith.constant 0 : i32
    return %c0_i32, %c0_i32_0 : i32, i32
  }
  func.func @transform_12(%arg0: i32) -> (i32, i32) {
    %c0_i32 = arith.constant 0 : i32
    %c0_i32_0 = arith.constant 0 : i32
    %c0_i32_1 = arith.constant 0 : i32
    return %c0_i32, %c0_i32_0 : i32, i32
  }
  func.func @transform_13(%arg0: i32) -> (i32, i32) {
    %c0_i32 = arith.constant 0 : i32
    %c0_i32_0 = arith.constant 0 : i32
    return %arg0, %c0_i32 : i32, i32
  }
  func.func @transform_14(%arg0: i32) -> (i32, i32) {
    %c0_i32 = arith.constant 0 : i32
    %c0_i32_0 = arith.constant 0 : i32
    return %arg0, %c0_i32 : i32, i32
  }
  func.func @transform_15(%arg0: i32) -> (i32, i32) {
    %c0_i32 = arith.constant 0 : i32
    %c0_i32_0 = arith.constant 0 : i32
    return %arg0, %c0_i32 : i32, i32
  }
  func.func @transform_16(%arg0: i32) -> (i32, i32) {
    %c0_i32 = arith.constant 0 : i32
    %c0_i32_0 = arith.constant 0 : i32
    return %arg0, %c0_i32 : i32, i32
  }
  func.func @transform_17(%arg0: i32) -> (i32, i32) {
    %c0_i32 = arith.constant 0 : i32
    %c0_i32_0 = arith.constant 0 : i32
    return %arg0, %c0_i32 : i32, i32
  }
  func.func @transform_18(%arg0: i32) -> (i32, i32) {
    %c0_i32 = arith.constant 0 : i32
    %c0_i32_0 = arith.constant 0 : i32
    return %arg0, %c0_i32 : i32, i32
  }
}

</mosaic_0001>

<llo_original>
// kernel: tpu_custom_call.1
$region0: #{tpu_custom_call.1}
  #allocation0 [shape = 'u32[]', space=smem, size = 0x4, offset = 0x4, fixed_abs, tag = 'smem constant byte address 0x4 - core index']
  #allocation1 [shape = 'u32[72,128]{1,0:T(1,128)}', space=vmem, size = 0x9000, scoped, tag = 'internal scratch']
  %s0 = inlined_call_operand.hbm [shape: f32[8,896], index: 0, kind: input, shape index: {}]
  %s1 = inlined_call_operand.hbm [shape: bf16[896,128], index: 1, kind: input, shape index: {}]
  %s2 = inlined_call_operand.vmem [shape: f32[1,128], index: 2, kind: input, shape index: {}]
  %s3 = inlined_call_operand.hbm [shape: bf16[128,128], index: 3, kind: input, shape index: {}]
  %s4 = inlined_call_operand.vmem [shape: f32[1,128], index: 4, kind: input, shape index: {}]
  %s5 = inlined_call_operand.hbm [shape: bf16[128,128], index: 5, kind: input, shape index: {}]
  %s6 = inlined_call_operand.vmem [shape: f32[1,128], index: 6, kind: input, shape index: {}]
  %s7 = inlined_call_operand.hbm [shape: bf16[128,128], index: 7, kind: input, shape index: {}]
  %s8 = inlined_call_operand.vmem [shape: f32[1,128], index: 8, kind: input, shape index: {}]
  %s9 = inlined_call_operand.hbm [shape: bf16[128,128], index: 9, kind: input, shape index: {}]
  %s10 = inlined_call_operand.hbm [shape: f32[1,128], index: 10, kind: input, shape index: {}]
  %s11 = inlined_call_operand.hbm [shape: bf16[128,896], index: 11, kind: input, shape index: {}]
  %s12 = inlined_call_operand.vmem [shape: f32[1,896], index: 12, kind: input, shape index: {}]
  %s13 = inlined_call_operand.hbm [shape: f32[8,128], index: 13, kind: output, shape index: {0}]
  %s14 = inlined_call_operand.hbm [shape: f32[8,128], index: 14, kind: output, shape index: {1}]
  %s15 = inlined_call_operand.hbm [shape: f32[8,128], index: 15, kind: output, shape index: {2}]
  %s16 = inlined_call_operand.hbm [shape: f32[8,128], index: 16, kind: output, shape index: {3}]
  %s17 = inlined_call_operand.hbm [shape: f32[8,128], index: 17, kind: output, shape index: {4}]
  %s18 = inlined_call_operand.hbm [shape: f32[8,896], index: 18, kind: output, shape index: {5}]
  %19 = xla_tuple %s13, %s14, %s15, %s16, %s17, %s18
  %s20 = sld [smem:[#allocation0]]
  $region134: #{tpu_custom_call.1} parent=0
    _
  %s22 = ssub.s32 1, %s20
  %s23 = scalar_select 0, %s22, %s20
  $region1: #{tpu_custom_call.1} parent=0
    #allocation2 [shape = 'u8[28672]{0}', space=vmem, size = 0x7000, scoped, tag = 'input window, operand 0, single buffered']
    #allocation3 [shape = 's32[1]{0}', space=sflag, size = 0x4, scoped, tag = 'scoped memory for tpu_custom_call.1']
    #allocation4 [shape = 's32[1]{0}', space=sflag, size = 0x4, scoped, tag = 'scoped memory for tpu_custom_call.1']
    #allocation5 [shape = 'u8[229376]{0}', space=vmem, size = 0x38000, scoped, tag = 'input window, operand 1, single buffered']
    #allocation6 [shape = 's32[1]{0}', space=sflag, size = 0x4, scoped, tag = 'scoped memory for tpu_custom_call.1']
    #allocation7 [shape = 'u8[32768]{0}', space=vmem, size = 0x8000, scoped, tag = 'input window, operand 3, single buffered']
    #allocation8 [shape = 'u8[32768]{0}', space=vmem, size = 0x8000, scoped, tag = 'input window, operand 5, single buffered']
    #allocation9 [shape = 's32[1]{0}', space=sflag, size = 0x4, scoped, tag = 'scoped memory for tpu_custom_call.1']
    #allocation10 [shape = 'u8[32768]{0}', space=vmem, size = 0x8000, scoped, tag = 'input window, operand 7, single buffered']
    #allocation11 [shape = 'u8[32768]{0}', space=vmem, size = 0x8000, scoped, tag = 'input window, operand 9, single buffered']
    #allocation12 [shape = 's32[1]{0}', space=sflag, size = 0x4, scoped, tag = 'scoped memory for tpu_custom_call.1']
    #allocation13 [shape = 'u8[512]{0}', space=vmem, size = 0x400, scoped, tag = 'input window, operand 10, single buffered']
    #allocation14 [shape = 'u8[229376]{0}', space=vmem, size = 0x38000, scoped, tag = 'input window, operand 11, single buffered']
    #allocation15 [shape = 's32[1]{0}', space=sflag, size = 0x4, scoped, tag = 'scoped memory for tpu_custom_call.1']
    #allocation16 [shape = 'u8[4096]{0}', space=vmem, size = 0x1000, scoped, tag = 'output window, operand 0, single buffered']
    #allocation17 [shape = 'u8[4096]{0}', space=vmem, size = 0x1000, scoped, tag = 'output window, operand 1, single buffered']
    #allocation18 [shape = 's32[1]{0}', space=sflag, size = 0x4, scoped, tag = 'scoped memory for tpu_custom_call.1']
    #allocation19 [shape = 'u8[4096]{0}', space=vmem, size = 0x1000, scoped, tag = 'output window, operand 2, single buffered']
    #allocation20 [shape = 'u8[4096]{0}', space=vmem, size = 0x1000, scoped, tag = 'output window, operand 3, single buffered']
    #allocation21 [shape = 's32[1]{0}', space=sflag, size = 0x4, scoped, tag = 'scoped memory for tpu_custom_call.1']
    #allocation22 [shape = 'u8[4096]{0}', space=vmem, size = 0x1000, scoped, tag = 'output window, operand 4, single buffered']
    #allocation23 [shape = 'u8[28672]{0}', space=vmem, size = 0x7000, scoped, tag = 'output window, operand 5, single buffered']
    #allocation24 [shape = 's32[1]{0}', space=sflag, size = 0x4, scoped, tag = 'scoped memory for tpu_custom_call.1']
    %24 = vsyncpa [#allocation3], 0
    %25 = vsyncpa [#allocation6], 0
    %26 = vsyncpa [#allocation9], 0
    %27 = vsyncpa [#allocation12], 0
    %28 = vsyncpa [#allocation15], 0
    %29 = vsyncpa [#allocation4], 0
    %30 = vsyncpa [#allocation18], 0
    %31 = vsyncpa [#allocation21], 0
    %32 = vsyncpa [#allocation24], 0
    // Predicated region
    $region2: #{tpu_custom_call.1} parent=1 // pred_check
      _
    $region3: #{tpu_custom_call.1} parent=1 // pred_check_branch
      %34 = sbr.rel (0) target = $region5
    $region4: #{tpu_custom_call.1} parent=1 // pred_region
      %36 = vsyncadd [#allocation3], 0
      %s38 = sshll.u32 %s0, 4
      %s39 = int_to_ptr.hbm [resolvable:$true] %s38
      %s40 = sshll.u32 [#allocation2], 4
      %s41 = int_to_ptr.vmem [resolvable:$true] %s40
      %43 = dma.hbm_to_vmem [thread:$0]  %s39, 896, %s41, [#allocation3]
    $region5: #{tpu_custom_call.1} parent=1 // pred_fallthru
      _
    // Predicated region
    $region6: #{tpu_custom_call.1} parent=1 // pred_check
      _
    $region7: #{tpu_custom_call.1} parent=1 // pred_check_branch
      %45 = sbr.rel (0) target = $region9
    $region8: #{tpu_custom_call.1} parent=1 // pred_region
      %47 = vsyncadd [#allocation6], 0
      %s48 = sshll.u32 %s1, 4
      %s49 = int_to_ptr.hbm [resolvable:$true] %s48
      %s50 = sshll.u32 [#allocation5], 4
      %s51 = int_to_ptr.vmem [resolvable:$true] %s50
      %56 = dma.hbm_to_vmem [thread:$0]  %s49, 7168, %s51, [#allocation6], 64, 64, 4
    $region9: #{tpu_custom_call.1} parent=1 // pred_fallthru
      _
    // Predicated region
    $region10: #{tpu_custom_call.1} parent=1 // pred_check
      _
    $region11: #{tpu_custom_call.1} parent=1 // pred_check_branch
      %58 = sbr.rel (0) target = $region13
    $region12: #{tpu_custom_call.1} parent=1 // pred_region
      _
    $region13: #{tpu_custom_call.1} parent=1 // pred_fallthru
      _
    // Predicated region
    $region14: #{tpu_custom_call.1} parent=1 // pred_check
      _
    $region15: #{tpu_custom_call.1} parent=1 // pred_check_branch
      %60 = sbr.rel (0) target = $region17
    $region16: #{tpu_custom_call.1} parent=1 // pred_region
      %62 = vsyncadd [#allocation6], 0
      %s63 = sshll.u32 %s3, 4
      %s64 = int_to_ptr.hbm [resolvable:$true] %s63
      %s65 = sshll.u32 [#allocation7], 4
      %s66 = int_to_ptr.vmem [resolvable:$true] %s65
      %71 = dma.hbm_to_vmem [thread:$0]  %s64, 1024, %s66, [#allocation6], 64, 64, 4
    $region17: #{tpu_custom_call.1} parent=1 // pred_fallthru
      _
    // Predicated region
    $region18: #{tpu_custom_call.1} parent=1 // pred_check
      _
    $region19: #{tpu_custom_call.1} parent=1 // pred_check_branch
      %73 = sbr.rel (0) target = $region21
    $region20: #{tpu_custom_call.1} parent=1 // pred_region
      _
    $region21: #{tpu_custom_call.1} parent=1 // pred_fallthru
      _
    // Predicated region
    $region22: #{tpu_custom_call.1} parent=1 // pred_check
      _
    $region23: #{tpu_custom_call.1} parent=1 // pred_check_branch
      %75 = sbr.rel (0) target = $region25
    $region24: #{tpu_custom_call.1} parent=1 // pred_region
      %77 = vsyncadd [#allocation9], 0
      %s78 = sshll.u32 %s5, 4
      %s79 = int_to_ptr.hbm [resolvable:$true] %s78
      %s80 = sshll.u32 [#allocation8], 4
      %s81 = int_to_ptr.vmem [resolvable:$true] %s80
      %86 = dma.hbm_to_vmem [thread:$0]  %s79, 1024, %s81, [#allocation9], 64, 64, 4
    $region25: #{tpu_custom_call.1} parent=1 // pred_fallthru
      _
    // Predicated region
    $region26: #{tpu_custom_call.1} parent=1 // pred_check
      _
    $region27: #{tpu_custom_call.1} parent=1 // pred_check_branch
      %88 = sbr.rel (0) target = $region29
    $region28: #{tpu_custom_call.1} parent=1 // pred_region
      _
    $region29: #{tpu_custom_call.1} parent=1 // pred_fallthru
      _
    // Predicated region
    $region30: #{tpu_custom_call.1} parent=1 // pred_check
      _
    $region31: #{tpu_custom_call.1} parent=1 // pred_check_branch
      %90 = sbr.rel (0) target = $region33
    $region32: #{tpu_custom_call.1} parent=1 // pred_region
      %92 = vsyncadd [#allocation9], 0
      %s93 = sshll.u32 %s7, 4
      %s94 = int_to_ptr.hbm [resolvable:$true] %s93
      %s95 = sshll.u32 [#allocation10], 4
      %s96 = int_to_ptr.vmem [resolvable:$true] %s95
      %101 = dma.hbm_to_vmem [thread:$0]  %s94, 1024, %s96, [#allocation9], 64, 64, 4
    $region33: #{tpu_custom_call.1} parent=1 // pred_fallthru
      _
    // Predicated region
    $region34: #{tpu_custom_call.1} parent=1 // pred_check
      _
    $region35: #{tpu_custom_call.1} parent=1 // pred_check_branch
      %103 = sbr.rel (0) target = $region37
    $region36: #{tpu_custom_call.1} parent=1 // pred_region
      _
    $region37: #{tpu_custom_call.1} parent=1 // pred_fallthru
      _
    // Predicated region
    $region38: #{tpu_custom_call.1} parent=1 // pred_check
      _
    $region39: #{tpu_custom_call.1} parent=1 // pred_check_branch
      %105 = sbr.rel (0) target = $region41
    $region40: #{tpu_custom_call.1} parent=1 // pred_region
      %107 = vsyncadd [#allocation12], 0
      %s108 = sshll.u32 %s9, 4
      %s109 = int_to_ptr.hbm [resolvable:$true] %s108
      %s110 = sshll.u32 [#allocation11], 4
      %s111 = int_to_ptr.vmem [resolvable:$true] %s110
      %116 = dma.hbm_to_vmem [thread:$0]  %s109, 1024, %s111, [#allocation12], 64, 64, 4
    $region41: #{tpu_custom_call.1} parent=1 // pred_fallthru
      _
    // Predicated region
    $region42: #{tpu_custom_call.1} parent=1 // pred_check
      _
    $region43: #{tpu_custom_call.1} parent=1 // pred_check_branch
      %118 = sbr.rel (0) target = $region45
    $region44: #{tpu_custom_call.1} parent=1 // pred_region
      %120 = vsyncadd [#allocation12], 0
      %s122 = sshll.u32 %s10, 4
      %s123 = int_to_ptr.hbm [resolvable:$true] %s122
      %s124 = sshll.u32 [#allocation13], 4
      %s125 = int_to_ptr.vmem [resolvable:$true] %s124
      %127 = dma.hbm_to_vmem [thread:$0]  %s123, 16, %s125, [#allocation12]
    $region45: #{tpu_custom_call.1} parent=1 // pred_fallthru
      _
    // Predicated region
    $region46: #{tpu_custom_call.1} parent=1 // pred_check
      _
    $region47: #{tpu_custom_call.1} parent=1 // pred_check_branch
      %129 = sbr.rel (0) target = $region49
    $region48: #{tpu_custom_call.1} parent=1 // pred_region
      %131 = vsyncadd [#allocation15], 0
      %s132 = sshll.u32 %s11, 4
      %s133 = int_to_ptr.hbm [resolvable:$true] %s132
      %s134 = sshll.u32 [#allocation14], 4
      %s135 = int_to_ptr.vmem [resolvable:$true] %s134
      %140 = dma.hbm_to_vmem [thread:$0]  %s133, 7168, %s135, [#allocation15], 448, 448, 28
    $region49: #{tpu_custom_call.1} parent=1 // pred_fallthru
      _
    // Predicated region
    $region50: #{tpu_custom_call.1} parent=1 // pred_check
      _
    $region51: #{tpu_custom_call.1} parent=1 // pred_check_branch
      %142 = sbr.rel (0) target = $region53
    $region52: #{tpu_custom_call.1} parent=1 // pred_region
      _
    $region53: #{tpu_custom_call.1} parent=1 // pred_fallthru
      _
    // Predicated region
    $region54: #{tpu_custom_call.1} parent=1 // pred_check
      _
    $region55: #{tpu_custom_call.1} parent=1 // pred_check_branch
      %144 = sbr.rel (0) target = $region57
    $region56: #{tpu_custom_call.1} parent=1 // pred_region
      %146 = dma.done [#allocation3], 896
    $region57: #{tpu_custom_call.1} parent=1 // pred_fallthru
      _
    // Predicated region
    $region58: #{tpu_custom_call.1} parent=1 // pred_check
      _
    $region59: #{tpu_custom_call.1} parent=1 // pred_check_branch
      %148 = sbr.rel (0) target = $region61
    $region60: #{tpu_custom_call.1} parent=1 // pred_region
      %150 = dma.done [#allocation6], 7168
    $region61: #{tpu_custom_call.1} parent=1 // pred_fallthru
      _
    // Predicated region
    $region62: #{tpu_custom_call.1} parent=1 // pred_check
      _
    $region63: #{tpu_custom_call.1} parent=1 // pred_check_branch
      %152 = sbr.rel (0) target = $region65
    $region64: #{tpu_custom_call.1} parent=1 // pred_region
      %154 = dma.done [#allocation6], 1024
    $region65: #{tpu_custom_call.1} parent=1 // pred_fallthru
      _
    // Predicated region
    $region66: #{tpu_custom_call.1} parent=1 // pred_check
      _
    $region67: #{tpu_custom_call.1} parent=1 // pred_check_branch
      %156 = sbr.rel (0) target = $region69
    $region68: #{tpu_custom_call.1} parent=1 // pred_region
      %158 = dma.done [#allocation9], 1024
    $region69: #{tpu_custom_call.1} parent=1 // pred_fallthru
      _
    // Predicated region
    $region70: #{tpu_custom_call.1} parent=1 // pred_check
      _
    $region71: #{tpu_custom_call.1} parent=1 // pred_check_branch
      %160 = sbr.rel (0) target = $region73
    $region72: #{tpu_custom_call.1} parent=1 // pred_region
      %162 = dma.done [#allocation9], 1024
    $region73: #{tpu_custom_call.1} parent=1 // pred_fallthru
      _
    // Predicated region
    $region74: #{tpu_custom_call.1} parent=1 // pred_check
      _
    $region75: #{tpu_custom_call.1} parent=1 // pred_check_branch
      %164 = sbr.rel (0) target = $region77
    $region76: #{tpu_custom_call.1} parent=1 // pred_region
      %166 = dma.done [#allocation12], 1024
    $region77: #{tpu_custom_call.1} parent=1 // pred_fallthru
      _
    // Predicated region
    $region78: #{tpu_custom_call.1} parent=1 // pred_check
      _
    $region79: #{tpu_custom_call.1} parent=1 // pred_check_branch
      %168 = sbr.rel (0) target = $region81
    $region80: #{tpu_custom_call.1} parent=1 // pred_region
      %170 = dma.done [#allocation12], 16
    $region81: #{tpu_custom_call.1} parent=1 // pred_fallthru
      _
    // Predicated region
    $region82: #{tpu_custom_call.1} parent=1 // pred_check
      _
    $region83: #{tpu_custom_call.1} parent=1 // pred_check_branch
      %172 = sbr.rel (0) target = $region85
    $region84: #{tpu_custom_call.1} parent=1 // pred_region
      %174 = dma.done [#allocation15], 7168
    $region85: #{tpu_custom_call.1} parent=1 // pred_fallthru
      _
    %v175 = vld [vmem:[#allocation2] sm:$0xff]
    %v176 = vld [vmem:[#allocation2 + $0x8] sm:$0xff]
    %v177 = vld [vmem:[#allocation2 + $0x10] sm:$0xff]
    %v178 = vld [vmem:[#allocation2 + $0x18] sm:$0xff]
    %v179 = vld [vmem:[#allocation2 + $0x20] sm:$0xff]
    %v180 = vld [vmem:[#allocation2 + $0x28] sm:$0xff]
    %v181 = vld [vmem:[#allocation2 + $0x30] sm:$0xff]
    %v182 = vld [vmem:[#allocation5] sm:$0xf]
    %v183 = vld [vmem:[#allocation5 + $0x4] sm:$0xf]
    %v184 = vld [vmem:[#allocation5 + $0x8] sm:$0xf]
    %v185 = vld [vmem:[#allocation5 + $0xc] sm:$0xf]
    %v186 = vld [vmem:[#allocation5 + $0x10] sm:$0xf]
    %v187 = vld [vmem:[#allocation5 + $0x14] sm:$0xf]
    %v188 = vld [vmem:[#allocation5 + $0x18] sm:$0xf]
    %v189 = vld [vmem:[#allocation5 + $0x1c] sm:$0xf]
    %v190 = vld [vmem:[#allocation5 + $0x20] sm:$0xf]
    %v191 = vld [vmem:[#allocation5 + $0x24] sm:$0xf]
    %v192 = vld [vmem:[#allocation5 + $0x28] sm:$0xf]
    %v193 = vld [vmem:[#allocation5 + $0x2c] sm:$0xf]
    %v194 = vld [vmem:[#allocation5 + $0x30] sm:$0xf]
    %v195 = vld [vmem:[#allocation5 + $0x34] sm:$0xf]
    %v196 = vld [vmem:[#allocation5 + $0x38] sm:$0xf]
    %v197 = vld [vmem:[#allocation5 + $0x3c] sm:$0xf]
    %v198 = vld [vmem:[#allocation5 + $0x40] sm:$0xf]
    %v199 = vld [vmem:[#allocation5 + $0x44] sm:$0xf]
    %v200 = vld [vmem:[#allocation5 + $0x48] sm:$0xf]
    %v201 = vld [vmem:[#allocation5 + $0x4c] sm:$0xf]
    %v202 = vld [vmem:[#allocation5 + $0x50] sm:$0xf]
    %v203 = vld [vmem:[#allocation5 + $0x54] sm:$0xf]
    %v204 = vld [vmem:[#allocation5 + $0x58] sm:$0xf]
    %v205 = vld [vmem:[#allocation5 + $0x5c] sm:$0xf]
    %v206 = vld [vmem:[#allocation5 + $0x60] sm:$0xf]
    %v207 = vld [vmem:[#allocation5 + $0x64] sm:$0xf]
    %v208 = vld [vmem:[#allocation5 + $0x68] sm:$0xf]
    %v209 = vld [vmem:[#allocation5 + $0x6c] sm:$0xf]
    %v210 = vld [vmem:[#allocation5 + $0x70] sm:$0xf]
    %v211 = vld [vmem:[#allocation5 + $0x74] sm:$0xf]
    %v212 = vld [vmem:[#allocation5 + $0x78] sm:$0xf]
    %v213 = vld [vmem:[#allocation5 + $0x7c] sm:$0xf]
    %v214 = vld [vmem:[#allocation5 + $0x80] sm:$0xf]
    %v215 = vld [vmem:[#allocation5 + $0x84] sm:$0xf]
    %v216 = vld [vmem:[#allocation5 + $0x88] sm:$0xf]
    %v217 = vld [vmem:[#allocation5 + $0x8c] sm:$0xf]
    %v218 = vld [vmem:[#allocation5 + $0x90] sm:$0xf]
    %v219 = vld [vmem:[#allocation5 + $0x94] sm:$0xf]
    %v220 = vld [vmem:[#allocation5 + $0x98] sm:$0xf]
    %v221 = vld [vmem:[#allocation5 + $0x9c] sm:$0xf]
    %v222 = vld [vmem:[#allocation5 + $0xa0] sm:$0xf]
    %v223 = vld [vmem:[#allocation5 + $0xa4] sm:$0xf]
    %v224 = vld [vmem:[#allocation5 + $0xa8] sm:$0xf]
    %v225 = vld [vmem:[#allocation5 + $0xac] sm:$0xf]
    %v226 = vld [vmem:[#allocation5 + $0xb0] sm:$0xf]
    %v227 = vld [vmem:[#allocation5 + $0xb4] sm:$0xf]
    %v228 = vld [vmem:[#allocation5 + $0xb8] sm:$0xf]
    %v229 = vld [vmem:[#allocation5 + $0xbc] sm:$0xf]
    %v230 = vld [vmem:[#allocation5 + $0xc0] sm:$0xf]
    %v231 = vld [vmem:[#allocation5 + $0xc4] sm:$0xf]
    %v232 = vld [vmem:[#allocation5 + $0xc8] sm:$0xf]
    %v233 = vld [vmem:[#allocation5 + $0xcc] sm:$0xf]
    %v234 = vld [vmem:[#allocation5 + $0xd0] sm:$0xf]
    %v235 = vld [vmem:[#allocation5 + $0xd4] sm:$0xf]
    %v236 = vld [vmem:[#allocation5 + $0xd8] sm:$0xf]
    %v237 = vld [vmem:[#allocation5 + $0xdc] sm:$0xf]
    %v238 = vld [vmem:[#allocation5 + $0xe0] sm:$0xf]
    %v239 = vld [vmem:[#allocation5 + $0xe4] sm:$0xf]
    %v240 = vld [vmem:[#allocation5 + $0xe8] sm:$0xf]
    %v241 = vld [vmem:[#allocation5 + $0xec] sm:$0xf]
    %v242 = vld [vmem:[#allocation5 + $0xf0] sm:$0xf]
    %v243 = vld [vmem:[#allocation5 + $0xf4] sm:$0xf]
    %v244 = vld [vmem:[#allocation5 + $0xf8] sm:$0xf]
    %v245 = vld [vmem:[#allocation5 + $0xfc] sm:$0xf]
    %v246 = vld [vmem:[#allocation5 + $0x100] sm:$0xf]
    %v247 = vld [vmem:[#allocation5 + $0x104] sm:$0xf]
    %v248 = vld [vmem:[#allocation5 + $0x108] sm:$0xf]
    %v249 = vld [vmem:[#allocation5 + $0x10c] sm:$0xf]
    %v250 = vld [vmem:[#allocation5 + $0x110] sm:$0xf]
    %v251 = vld [vmem:[#allocation5 + $0x114] sm:$0xf]
    %v252 = vld [vmem:[#allocation5 + $0x118] sm:$0xf]
    %v253 = vld [vmem:[#allocation5 + $0x11c] sm:$0xf]
    %v254 = vld [vmem:[#allocation5 + $0x120] sm:$0xf]
    %v255 = vld [vmem:[#allocation5 + $0x124] sm:$0xf]
    %v256 = vld [vmem:[#allocation5 + $0x128] sm:$0xf]
    %v257 = vld [vmem:[#allocation5 + $0x12c] sm:$0xf]
    %v258 = vld [vmem:[#allocation5 + $0x130] sm:$0xf]
    %v259 = vld [vmem:[#allocation5 + $0x134] sm:$0xf]
    %v260 = vld [vmem:[#allocation5 + $0x138] sm:$0xf]
    %v261 = vld [vmem:[#allocation5 + $0x13c] sm:$0xf]
    %v262 = vld [vmem:[#allocation5 + $0x140] sm:$0xf]
    %v263 = vld [vmem:[#allocation5 + $0x144] sm:$0xf]
    %v264 = vld [vmem:[#allocation5 + $0x148] sm:$0xf]
    %v265 = vld [vmem:[#allocation5 + $0x14c] sm:$0xf]
    %v266 = vld [vmem:[#allocation5 + $0x150] sm:$0xf]
    %v267 = vld [vmem:[#allocation5 + $0x154] sm:$0xf]
    %v268 = vld [vmem:[#allocation5 + $0x158] sm:$0xf]
    %v269 = vld [vmem:[#allocation5 + $0x15c] sm:$0xf]
    %v270 = vld [vmem:[#allocation5 + $0x160] sm:$0xf]
    %v271 = vld [vmem:[#allocation5 + $0x164] sm:$0xf]
    %v272 = vld [vmem:[#allocation5 + $0x168] sm:$0xf]
    %v273 = vld [vmem:[#allocation5 + $0x16c] sm:$0xf]
    %v274 = vld [vmem:[#allocation5 + $0x170] sm:$0xf]
    %v275 = vld [vmem:[#allocation5 + $0x174] sm:$0xf]
    %v276 = vld [vmem:[#allocation5 + $0x178] sm:$0xf]
    %v277 = vld [vmem:[#allocation5 + $0x17c] sm:$0xf]
    %v278 = vld [vmem:[#allocation5 + $0x180] sm:$0xf]
    %v279 = vld [vmem:[#allocation5 + $0x184] sm:$0xf]
    %v280 = vld [vmem:[#allocation5 + $0x188] sm:$0xf]
    %v281 = vld [vmem:[#allocation5 + $0x18c] sm:$0xf]
    %v282 = vld [vmem:[#allocation5 + $0x190] sm:$0xf]
    %v283 = vld [vmem:[#allocation5 + $0x194] sm:$0xf]
    %v284 = vld [vmem:[#allocation5 + $0x198] sm:$0xf]
    %v285 = vld [vmem:[#allocation5 + $0x19c] sm:$0xf]
    %v286 = vld [vmem:[#allocation5 + $0x1a0] sm:$0xf]
    %v287 = vld [vmem:[#allocation5 + $0x1a4] sm:$0xf]
    %v288 = vld [vmem:[#allocation5 + $0x1a8] sm:$0xf]
    %v289 = vld [vmem:[#allocation5 + $0x1ac] sm:$0xf]
    %v290 = vld [vmem:[#allocation5 + $0x1b0] sm:$0xf]
    %v291 = vld [vmem:[#allocation5 + $0x1b4] sm:$0xf]
    %v292 = vld [vmem:[#allocation5 + $0x1b8] sm:$0xf]
    %v293 = vld [vmem:[#allocation5 + $0x1bc] sm:$0xf]
    %v294 = vld [vmem:[%s2] sm:$0x1]
    %v295 = vpack.c.bf16 %v175, %v175
    %v296 = vpack.c.bf16 %v176, %v176
    %v297 = vpack.c.bf16 %v177, %v177
    %v298 = vpack.c.bf16 %v178, %v178
    %v299 = vpack.c.bf16 %v179, %v179
    %v300 = vpack.c.bf16 %v180, %v180
    %v301 = vpack.c.bf16 %v181, %v181
    %v303 = vperm.slane %v294, 0
    %v417 = vunpack.c.l.b16 %v182
    %v418 = vunpack.c.l.b16 %v183
    %v419 = vunpack.c.l.b16 %v184
    %v420 = vunpack.c.l.b16 %v185
    %v421 = vunpack.c.l.b16 %v186
    %v422 = vunpack.c.l.b16 %v187
    %v423 = vunpack.c.l.b16 %v188
    %v424 = vunpack.c.l.b16 %v189
    %v425 = vunpack.c.l.b16 %v190
    %v426 = vunpack.c.l.b16 %v191
    %v427 = vunpack.c.l.b16 %v192
    %v428 = vunpack.c.l.b16 %v193
    %v429 = vunpack.c.l.b16 %v194
    %v430 = vunpack.c.l.b16 %v195
    %v431 = vunpack.c.l.b16 %v196
    %v432 = vunpack.c.l.b16 %v197
    %v433 = vunpack.c.l.b16 %v198
    %v434 = vunpack.c.l.b16 %v199
    %v435 = vunpack.c.l.b16 %v200
    %v436 = vunpack.c.l.b16 %v201
    %v437 = vunpack.c.l.b16 %v202
    %v438 = vunpack.c.l.b16 %v203
    %v439 = vunpack.c.l.b16 %v204
    %v440 = vunpack.c.l.b16 %v205
    %v441 = vunpack.c.l.b16 %v206
    %v442 = vunpack.c.l.b16 %v207
    %v443 = vunpack.c.l.b16 %v208
    %v444 = vunpack.c.l.b16 %v209
    %v445 = vunpack.c.l.b16 %v210
    %v446 = vunpack.c.l.b16 %v211
    %v447 = vunpack.c.l.b16 %v212
    %v448 = vunpack.c.l.b16 %v213
    %v449 = vunpack.c.l.b16 %v214
    %v450 = vunpack.c.l.b16 %v215
    %v451 = vunpack.c.l.b16 %v216
    %v452 = vunpack.c.l.b16 %v217
    %v453 = vunpack.c.l.b16 %v218
    %v454 = vunpack.c.l.b16 %v219
    %v455 = vunpack.c.l.b16 %v220
    %v456 = vunpack.c.l.b16 %v221
    %v457 = vunpack.c.l.b16 %v222
    %v458 = vunpack.c.l.b16 %v223
    %v459 = vunpack.c.l.b16 %v224
    %v460 = vunpack.c.l.b16 %v225
    %v461 = vunpack.c.l.b16 %v226
    %v462 = vunpack.c.l.b16 %v227
    %v463 = vunpack.c.l.b16 %v228
    %v464 = vunpack.c.l.b16 %v229
    %v465 = vunpack.c.l.b16 %v230
    %v466 = vunpack.c.l.b16 %v231
    %v467 = vunpack.c.l.b16 %v232
    %v468 = vunpack.c.l.b16 %v233
    %v469 = vunpack.c.l.b16 %v234
    %v470 = vunpack.c.l.b16 %v235
    %v471 = vunpack.c.l.b16 %v236
    %v472 = vunpack.c.l.b16 %v237
    %v473 = vunpack.c.l.b16 %v238
    %v474 = vunpack.c.l.b16 %v239
    %v475 = vunpack.c.l.b16 %v240
    %v476 = vunpack.c.l.b16 %v241
    %v477 = vunpack.c.l.b16 %v242
    %v478 = vunpack.c.l.b16 %v243
    %v479 = vunpack.c.l.b16 %v244
    %v480 = vunpack.c.l.b16 %v245
    %v481 = vunpack.c.l.b16 %v246
    %v482 = vunpack.c.l.b16 %v247
    %v483 = vunpack.c.l.b16 %v248
    %v484 = vunpack.c.l.b16 %v249
    %v485 = vunpack.c.l.b16 %v250
    %v486 = vunpack.c.l.b16 %v251
    %v487 = vunpack.c.l.b16 %v252
    %v488 = vunpack.c.l.b16 %v253
    %v489 = vunpack.c.l.b16 %v254
    %v490 = vunpack.c.l.b16 %v255
    %v491 = vunpack.c.l.b16 %v256
    %v492 = vunpack.c.l.b16 %v257
    %v493 = vunpack.c.l.b16 %v258
    %v494 = vunpack.c.l.b16 %v259
    %v495 = vunpack.c.l.b16 %v260
    %v496 = vunpack.c.l.b16 %v261
    %v497 = vunpack.c.l.b16 %v262
    %v498 = vunpack.c.l.b16 %v263
    %v499 = vunpack.c.l.b16 %v264
    %v500 = vunpack.c.l.b16 %v265
    %v501 = vunpack.c.l.b16 %v266
    %v502 = vunpack.c.l.b16 %v267
    %v503 = vunpack.c.l.b16 %v268
    %v504 = vunpack.c.l.b16 %v269
    %v505 = vunpack.c.l.b16 %v270
    %v506 = vunpack.c.l.b16 %v271
    %v507 = vunpack.c.l.b16 %v272
    %v508 = vunpack.c.l.b16 %v273
    %v509 = vunpack.c.l.b16 %v274
    %v510 = vunpack.c.l.b16 %v275
    %v511 = vunpack.c.l.b16 %v276
    %v512 = vunpack.c.l.b16 %v277
    %v513 = vunpack.c.l.b16 %v278
    %v514 = vunpack.c.l.b16 %v279
    %v515 = vunpack.c.l.b16 %v280
    %v516 = vunpack.c.l.b16 %v281
    %v517 = vunpack.c.l.b16 %v282
    %v518 = vunpack.c.l.b16 %v283
    %v519 = vunpack.c.l.b16 %v284
    %v520 = vunpack.c.l.b16 %v285
    %v521 = vunpack.c.l.b16 %v286
    %v522 = vunpack.c.l.b16 %v287
    %v523 = vunpack.c.l.b16 %v288
    %v524 = vunpack.c.l.b16 %v289
    %v525 = vunpack.c.l.b16 %v290
    %v526 = vunpack.c.l.b16 %v291
    %v527 = vunpack.c.l.b16 %v292
    %v528 = vunpack.c.l.b16 %v293
    %v529 = vpack.c.b16 %v418, %v417
    %v530 = vpack.c.b16 %v420, %v419
    %v531 = vpack.c.b16 %v422, %v421
    %v532 = vpack.c.b16 %v424, %v423
    %v533 = vpack.c.b16 %v426, %v425
    %v534 = vpack.c.b16 %v428, %v427
    %v535 = vpack.c.b16 %v430, %v429
    %v536 = vpack.c.b16 %v432, %v431
    %v537 = vpack.c.b16 %v434, %v433
    %v538 = vpack.c.b16 %v436, %v435
    %v539 = vpack.c.b16 %v438, %v437
    %v540 = vpack.c.b16 %v440, %v439
    %v541 = vpack.c.b16 %v442, %v441
    %v542 = vpack.c.b16 %v444, %v443
    %v543 = vpack.c.b16 %v446, %v445
    %v544 = vpack.c.b16 %v448, %v447
    %v545 = vpack.c.b16 %v450, %v449
    %v546 = vpack.c.b16 %v452, %v451
    %v547 = vpack.c.b16 %v454, %v453
    %v548 = vpack.c.b16 %v456, %v455
    %v549 = vpack.c.b16 %v458, %v457
    %v550 = vpack.c.b16 %v460, %v459
    %v551 = vpack.c.b16 %v462, %v461
    %v552 = vpack.c.b16 %v464, %v463
    %v553 = vpack.c.b16 %v466, %v465
    %v554 = vpack.c.b16 %v468, %v467
    %v555 = vpack.c.b16 %v470, %v469
    %v556 = vpack.c.b16 %v472, %v471
    %v557 = vpack.c.b16 %v474, %v473
    %v558 = vpack.c.b16 %v476, %v475
    %v559 = vpack.c.b16 %v478, %v477
    %v560 = vpack.c.b16 %v480, %v479
    %v561 = vpack.c.b16 %v482, %v481
    %v562 = vpack.c.b16 %v484, %v483
    %v563 = vpack.c.b16 %v486, %v485
    %v564 = vpack.c.b16 %v488, %v487
    %v565 = vpack.c.b16 %v490, %v489
    %v566 = vpack.c.b16 %v492, %v491
    %v567 = vpack.c.b16 %v494, %v493
    %v568 = vpack.c.b16 %v496, %v495
    %v569 = vpack.c.b16 %v498, %v497
    %v570 = vpack.c.b16 %v500, %v499
    %v571 = vpack.c.b16 %v502, %v501
    %v572 = vpack.c.b16 %v504, %v503
    %v573 = vpack.c.b16 %v506, %v505
    %v574 = vpack.c.b16 %v508, %v507
    %v575 = vpack.c.b16 %v510, %v509
    %v576 = vpack.c.b16 %v512, %v511
    %v577 = vpack.c.b16 %v514, %v513
    %v578 = vpack.c.b16 %v516, %v515
    %v579 = vpack.c.b16 %v518, %v517
    %v580 = vpack.c.b16 %v520, %v519
    %v581 = vpack.c.b16 %v522, %v521
    %v582 = vpack.c.b16 %v524, %v523
    %v583 = vpack.c.b16 %v526, %v525
    %v584 = vpack.c.b16 %v528, %v527
    %641 = vmatpush.bf16.msra.mxu0 %v536
    %642 = vmatpush.bf16.msra.mxu0 %v535
    %643 = vmatpush.bf16.msra.mxu0 %v534
    %644 = vmatpush.bf16.msra.mxu0 %v533
    %645 = vmatpush.bf16.msra.mxu0 %v532
    %646 = vmatpush.bf16.msra.mxu0 %v531
    %647 = vmatpush.bf16.msra.mxu0 %v530
    %648 = vmatpush.bf16.msra.mxu0 %v529
    %649 = vmatmul.bf16.gmra.mxu0 %v295
    %v650 = vpop.f32.mrf.mxu0
    %v651 = vadd.f32 %v303, %v650
    %v652 = vpop.f32.mrf.mxu0
    %653 = vdwg.mxu0
    %654 = vmatpush.bf16.msra.mxu0 %v544
    %655 = vmatpush.bf16.msra.mxu0 %v543
    %656 = vmatpush.bf16.msra.mxu0 %v542
    %657 = vmatpush.bf16.msra.mxu0 %v541
    %658 = vmatpush.bf16.msra.mxu0 %v540
    %659 = vmatpush.bf16.msra.mxu0 %v539
    %660 = vmatpush.bf16.msra.mxu0 %v538
    %661 = vmatpush.bf16.msra.mxu0 %v537
    %662 = vmatmul.bf16.gmra.mxu0 %v296
    %v663 = vpop.f32.mrf.mxu0
    %v664 = vadd.f32 %v651, %v663
    %v665 = vpop.f32.mrf.mxu0
    %666 = vdwg.mxu0
    %667 = vmatpush.bf16.msra.mxu0 %v552
    %668 = vmatpush.bf16.msra.mxu0 %v551
    %669 = vmatpush.bf16.msra.mxu0 %v550
    %670 = vmatpush.bf16.msra.mxu0 %v549
    %671 = vmatpush.bf16.msra.mxu0 %v548
    %672 = vmatpush.bf16.msra.mxu0 %v547
    %673 = vmatpush.bf16.msra.mxu0 %v546
    %674 = vmatpush.bf16.msra.mxu0 %v545
    %675 = vmatmul.bf16.gmra.mxu0 %v297
    %v676 = vpop.f32.mrf.mxu0
    %v677 = vadd.f32 %v664, %v676
    %v678 = vpop.f32.mrf.mxu0
    %679 = vdwg.mxu0
    %680 = vmatpush.bf16.msra.mxu0 %v560
    %681 = vmatpush.bf16.msra.mxu0 %v559
    %682 = vmatpush.bf16.msra.mxu0 %v558
    %683 = vmatpush.bf16.msra.mxu0 %v557
    %684 = vmatpush.bf16.msra.mxu0 %v556
    %685 = vmatpush.bf16.msra.mxu0 %v555
    %686 = vmatpush.bf16.msra.mxu0 %v554
    %687 = vmatpush.bf16.msra.mxu0 %v553
    %688 = vmatmul.bf16.gmra.mxu0 %v298
    %v689 = vpop.f32.mrf.mxu0
    %v690 = vadd.f32 %v677, %v689
    %v691 = vpop.f32.mrf.mxu0
    %692 = vdwg.mxu0
    %693 = vmatpush.bf16.msra.mxu0 %v568
    %694 = vmatpush.bf16.msra.mxu0 %v567
    %695 = vmatpush.bf16.msra.mxu0 %v566
    %696 = vmatpush.bf16.msra.mxu0 %v565
    %697 = vmatpush.bf16.msra.mxu0 %v564
    %698 = vmatpush.bf16.msra.mxu0 %v563
    %699 = vmatpush.bf16.msra.mxu0 %v562
    %700 = vmatpush.bf16.msra.mxu0 %v561
    %701 = vmatmul.bf16.gmra.mxu0 %v299
    %v702 = vpop.f32.mrf.mxu0
    %v703 = vadd.f32 %v690, %v702
    %v704 = vpop.f32.mrf.mxu0
    %705 = vdwg.mxu0
    %706 = vmatpush.bf16.msra.mxu0 %v576
    %707 = vmatpush.bf16.msra.mxu0 %v575
    %708 = vmatpush.bf16.msra.mxu0 %v574
    %709 = vmatpush.bf16.msra.mxu0 %v573
    %710 = vmatpush.bf16.msra.mxu0 %v572
    %711 = vmatpush.bf16.msra.mxu0 %v571
    %712 = vmatpush.bf16.msra.mxu0 %v570
    %713 = vmatpush.bf16.msra.mxu0 %v569
    %714 = vmatmul.bf16.gmra.mxu0 %v300
    %v715 = vpop.f32.mrf.mxu0
    %v716 = vadd.f32 %v703, %v715
    %v717 = vpop.f32.mrf.mxu0
    %718 = vdwg.mxu0
    %719 = vmatpush.bf16.msra.mxu0 %v584
    %720 = vmatpush.bf16.msra.mxu0 %v583
    %721 = vmatpush.bf16.msra.mxu0 %v582
    %722 = vmatpush.bf16.msra.mxu0 %v581
    %723 = vmatpush.bf16.msra.mxu0 %v580
    %724 = vmatpush.bf16.msra.mxu0 %v579
    %725 = vmatpush.bf16.msra.mxu0 %v578
    %726 = vmatpush.bf16.msra.mxu0 %v577
    %727 = vmatmul.bf16.gmra.mxu0 %v301
    %v728 = vpop.f32.mrf.mxu0
    %v729 = vadd.f32 %v716, %v728
    %v730 = vpop.f32.mrf.mxu0
    %731 = vdwg.mxu0
    %v732 = vmax.f32 %v729, 0.0
    %733 = vst [vmem:[#allocation16] sm:$0xff] %v732
    %v734 = vld [vmem:[#allocation7] sm:$0xf]
    %v735 = vld [vmem:[#allocation7 + $0x4] sm:$0xf]
    %v736 = vld [vmem:[#allocation7 + $0x8] sm:$0xf]
    %v737 = vld [vmem:[#allocation7 + $0xc] sm:$0xf]
    %v738 = vld [vmem:[#allocation7 + $0x10] sm:$0xf]
    %v739 = vld [vmem:[#allocation7 + $0x14] sm:$0xf]
    %v740 = vld [vmem:[#allocation7 + $0x18] sm:$0xf]
    %v741 = vld [vmem:[#allocation7 + $0x1c] sm:$0xf]
    %v742 = vld [vmem:[#allocation7 + $0x20] sm:$0xf]
    %v743 = vld [vmem:[#allocation7 + $0x24] sm:$0xf]
    %v744 = vld [vmem:[#allocation7 + $0x28] sm:$0xf]
    %v745 = vld [vmem:[#allocation7 + $0x2c] sm:$0xf]
    %v746 = vld [vmem:[#allocation7 + $0x30] sm:$0xf]
    %v747 = vld [vmem:[#allocation7 + $0x34] sm:$0xf]
    %v748 = vld [vmem:[#allocation7 + $0x38] sm:$0xf]
    %v749 = vld [vmem:[#allocation7 + $0x3c] sm:$0xf]
    %v750 = vld [vmem:[%s4] sm:$0x1]
    %v751 = vpack.c.bf16 %v732, %v732
    %v753 = vperm.slane %v750, 0
    %v771 = vunpack.c.l.b16 %v734
    %v772 = vunpack.c.l.b16 %v735
    %v773 = vunpack.c.l.b16 %v736
    %v774 = vunpack.c.l.b16 %v737
    %v775 = vunpack.c.l.b16 %v738
    %v776 = vunpack.c.l.b16 %v739
    %v777 = vunpack.c.l.b16 %v740
    %v778 = vunpack.c.l.b16 %v741
    %v779 = vunpack.c.l.b16 %v742
    %v780 = vunpack.c.l.b16 %v743
    %v781 = vunpack.c.l.b16 %v744
    %v782 = vunpack.c.l.b16 %v745
    %v783 = vunpack.c.l.b16 %v746
    %v784 = vunpack.c.l.b16 %v747
    %v785 = vunpack.c.l.b16 %v748
    %v786 = vunpack.c.l.b16 %v749
    %v787 = vpack.c.b16 %v772, %v771
    %v788 = vpack.c.b16 %v774, %v773
    %v789 = vpack.c.b16 %v776, %v775
    %v790 = vpack.c.b16 %v778, %v777
    %v791 = vpack.c.b16 %v780, %v779
    %v792 = vpack.c.b16 %v782, %v781
    %v793 = vpack.c.b16 %v784, %v783
    %v794 = vpack.c.b16 %v786, %v785
    %803 = vmatpush.bf16.msra.mxu0 %v794
    %804 = vmatpush.bf16.msra.mxu0 %v793
    %805 = vmatpush.bf16.msra.mxu0 %v792
    %806 = vmatpush.bf16.msra.mxu0 %v791
    %807 = vmatpush.bf16.msra.mxu0 %v790
    %808 = vmatpush.bf16.msra.mxu0 %v789
    %809 = vmatpush.bf16.msra.mxu0 %v788
    %810 = vmatpush.bf16.msra.mxu0 %v787
    %811 = vmatmul.bf16.gmra.mxu0 %v751
    %v812 = vpop.f32.mrf.mxu0
    %v813 = vadd.f32 %v753, %v812
    %v814 = vpop.f32.mrf.mxu0
    %815 = vdwg.mxu0
    %v816 = vmax.f32 %v813, 0.0
    %817 = vst [vmem:[#allocation17] sm:$0xff] %v816
    %v818 = vld [vmem:[#allocation8] sm:$0xf]
    %v819 = vld [vmem:[#allocation8 + $0x4] sm:$0xf]
    %v820 = vld [vmem:[#allocation8 + $0x8] sm:$0xf]
    %v821 = vld [vmem:[#allocation8 + $0xc] sm:$0xf]
    %v822 = vld [vmem:[#allocation8 + $0x10] sm:$0xf]
    %v823 = vld [vmem:[#allocation8 + $0x14] sm:$0xf]
    %v824 = vld [vmem:[#allocation8 + $0x18] sm:$0xf]
    %v825 = vld [vmem:[#allocation8 + $0x1c] sm:$0xf]
    %v826 = vld [vmem:[#allocation8 + $0x20] sm:$0xf]
    %v827 = vld [vmem:[#allocation8 + $0x24] sm:$0xf]
    %v828 = vld [vmem:[#allocation8 + $0x28] sm:$0xf]
    %v829 = vld [vmem:[#allocation8 + $0x2c] sm:$0xf]
    %v830 = vld [vmem:[#allocation8 + $0x30] sm:$0xf]
    %v831 = vld [vmem:[#allocation8 + $0x34] sm:$0xf]
    %v832 = vld [vmem:[#allocation8 + $0x38] sm:$0xf]
    %v833 = vld [vmem:[#allocation8 + $0x3c] sm:$0xf]
    %v834 = vld [vmem:[%s6] sm:$0x1]
    %v835 = vpack.c.bf16 %v816, %v816
    %v837 = vperm.slane %v834, 0
    %v855 = vunpack.c.l.b16 %v818
    %v856 = vunpack.c.l.b16 %v819
    %v857 = vunpack.c.l.b16 %v820
    %v858 = vunpack.c.l.b16 %v821
    %v859 = vunpack.c.l.b16 %v822
    %v860 = vunpack.c.l.b16 %v823
    %v861 = vunpack.c.l.b16 %v824
    %v862 = vunpack.c.l.b16 %v825
    %v863 = vunpack.c.l.b16 %v826
    %v864 = vunpack.c.l.b16 %v827
    %v865 = vunpack.c.l.b16 %v828
    %v866 = vunpack.c.l.b16 %v829
    %v867 = vunpack.c.l.b16 %v830
    %v868 = vunpack.c.l.b16 %v831
    %v869 = vunpack.c.l.b16 %v832
    %v870 = vunpack.c.l.b16 %v833
    %v871 = vpack.c.b16 %v856, %v855
    %v872 = vpack.c.b16 %v858, %v857
    %v873 = vpack.c.b16 %v860, %v859
    %v874 = vpack.c.b16 %v862, %v861
    %v875 = vpack.c.b16 %v864, %v863
    %v876 = vpack.c.b16 %v866, %v865
    %v877 = vpack.c.b16 %v868, %v867
    %v878 = vpack.c.b16 %v870, %v869
    %887 = vmatpush.bf16.msra.mxu0 %v878
    %888 = vmatpush.bf16.msra.mxu0 %v877
    %889 = vmatpush.bf16.msra.mxu0 %v876
    %890 = vmatpush.bf16.msra.mxu0 %v875
    %891 = vmatpush.bf16.msra.mxu0 %v874
    %892 = vmatpush.bf16.msra.mxu0 %v873
    %893 = vmatpush.bf16.msra.mxu0 %v872
    %894 = vmatpush.bf16.msra.mxu0 %v871
    %895 = vmatmul.bf16.gmra.mxu0 %v835
    %v896 = vpop.f32.mrf.mxu0
    %v897 = vadd.f32 %v837, %v896
    %v898 = vpop.f32.mrf.mxu0
    %899 = vdwg.mxu0
    %900 = vst [vmem:[#allocation19] sm:$0xff] %v897
    %v901 = vld [vmem:[#allocation10] sm:$0xf]
    %v902 = vld [vmem:[#allocation10 + $0x4] sm:$0xf]
    %v903 = vld [vmem:[#allocation10 + $0x8] sm:$0xf]
    %v904 = vld [vmem:[#allocation10 + $0xc] sm:$0xf]
    %v905 = vld [vmem:[#allocation10 + $0x10] sm:$0xf]
    %v906 = vld [vmem:[#allocation10 + $0x14] sm:$0xf]
    %v907 = vld [vmem:[#allocation10 + $0x18] sm:$0xf]
    %v908 = vld [vmem:[#allocation10 + $0x1c] sm:$0xf]
    %v909 = vld [vmem:[#allocation10 + $0x20] sm:$0xf]
    %v910 = vld [vmem:[#allocation10 + $0x24] sm:$0xf]
    %v911 = vld [vmem:[#allocation10 + $0x28] sm:$0xf]
    %v912 = vld [vmem:[#allocation10 + $0x2c] sm:$0xf]
    %v913 = vld [vmem:[#allocation10 + $0x30] sm:$0xf]
    %v914 = vld [vmem:[#allocation10 + $0x34] sm:$0xf]
    %v915 = vld [vmem:[#allocation10 + $0x38] sm:$0xf]
    %v916 = vld [vmem:[#allocation10 + $0x3c] sm:$0xf]
    %v917 = vld [vmem:[%s8] sm:$0x1]
    %v918 = vpack.c.bf16 %v897, %v897
    %v920 = vperm.slane %v917, 0
    %v938 = vunpack.c.l.b16 %v901
    %v939 = vunpack.c.l.b16 %v902
    %v940 = vunpack.c.l.b16 %v903
    %v941 = vunpack.c.l.b16 %v904
    %v942 = vunpack.c.l.b16 %v905
    %v943 = vunpack.c.l.b16 %v906
    %v944 = vunpack.c.l.b16 %v907
    %v945 = vunpack.c.l.b16 %v908
    %v946 = vunpack.c.l.b16 %v909
    %v947 = vunpack.c.l.b16 %v910
    %v948 = vunpack.c.l.b16 %v911
    %v949 = vunpack.c.l.b16 %v912
    %v950 = vunpack.c.l.b16 %v913
    %v951 = vunpack.c.l.b16 %v914
    %v952 = vunpack.c.l.b16 %v915
    %v953 = vunpack.c.l.b16 %v916
    %v954 = vpack.c.b16 %v939, %v938
    %v955 = vpack.c.b16 %v941, %v940
    %v956 = vpack.c.b16 %v943, %v942
    %v957 = vpack.c.b16 %v945, %v944
    %v958 = vpack.c.b16 %v947, %v946
    %v959 = vpack.c.b16 %v949, %v948
    %v960 = vpack.c.b16 %v951, %v950
    %v961 = vpack.c.b16 %v953, %v952
    %970 = vmatpush.bf16.msra.mxu0 %v961
    %971 = vmatpush.bf16.msra.mxu0 %v960
    %972 = vmatpush.bf16.msra.mxu0 %v959
    %973 = vmatpush.bf16.msra.mxu0 %v958
    %974 = vmatpush.bf16.msra.mxu0 %v957
    %975 = vmatpush.bf16.msra.mxu0 %v956
    %976 = vmatpush.bf16.msra.mxu0 %v955
    %977 = vmatpush.bf16.msra.mxu0 %v954
    %978 = vmatmul.bf16.gmra.mxu0 %v918
    %v979 = vpop.f32.mrf.mxu0
    %v980 = vadd.f32 %v920, %v979
    %v981 = vpop.f32.mrf.mxu0
    %982 = vdwg.mxu0
    %v983 = vmax.f32 %v980, 0.0
    %984 = vst [vmem:[#allocation20] sm:$0xff] %v983
    %v985 = vld [vmem:[#allocation11] sm:$0xf]
    %v986 = vld [vmem:[#allocation11 + $0x4] sm:$0xf]
    %v987 = vld [vmem:[#allocation11 + $0x8] sm:$0xf]
    %v988 = vld [vmem:[#allocation11 + $0xc] sm:$0xf]
    %v989 = vld [vmem:[#allocation11 + $0x10] sm:$0xf]
    %v990 = vld [vmem:[#allocation11 + $0x14] sm:$0xf]
    %v991 = vld [vmem:[#allocation11 + $0x18] sm:$0xf]
    %v992 = vld [vmem:[#allocation11 + $0x1c] sm:$0xf]
    %v993 = vld [vmem:[#allocation11 + $0x20] sm:$0xf]
    %v994 = vld [vmem:[#allocation11 + $0x24] sm:$0xf]
    %v995 = vld [vmem:[#allocation11 + $0x28] sm:$0xf]
    %v996 = vld [vmem:[#allocation11 + $0x2c] sm:$0xf]
    %v997 = vld [vmem:[#allocation11 + $0x30] sm:$0xf]
    %v998 = vld [vmem:[#allocation11 + $0x34] sm:$0xf]
    %v999 = vld [vmem:[#allocation11 + $0x38] sm:$0xf]
    %v1000 = vld [vmem:[#allocation11 + $0x3c] sm:$0xf]
    %v1001 = vld [vmem:[#allocation13] sm:$0x1]
    %v1002 = vpack.c.bf16 %v983, %v983
    %v1004 = vperm.slane %v1001, 0
    %v1022 = vunpack.c.l.b16 %v985
    %v1023 = vunpack.c.l.b16 %v986
    %v1024 = vunpack.c.l.b16 %v987
    %v1025 = vunpack.c.l.b16 %v988
    %v1026 = vunpack.c.l.b16 %v989
    %v1027 = vunpack.c.l.b16 %v990
    %v1028 = vunpack.c.l.b16 %v991
    %v1029 = vunpack.c.l.b16 %v992
    %v1030 = vunpack.c.l.b16 %v993
    %v1031 = vunpack.c.l.b16 %v994
    %v1032 = vunpack.c.l.b16 %v995
    %v1033 = vunpack.c.l.b16 %v996
    %v1034 = vunpack.c.l.b16 %v997
    %v1035 = vunpack.c.l.b16 %v998
    %v1036 = vunpack.c.l.b16 %v999
    %v1037 = vunpack.c.l.b16 %v1000
    %v1038 = vpack.c.b16 %v1023, %v1022
    %v1039 = vpack.c.b16 %v1025, %v1024
    %v1040 = vpack.c.b16 %v1027, %v1026
    %v1041 = vpack.c.b16 %v1029, %v1028
    %v1042 = vpack.c.b16 %v1031, %v1030
    %v1043 = vpack.c.b16 %v1033, %v1032
    %v1044 = vpack.c.b16 %v1035, %v1034
    %v1045 = vpack.c.b16 %v1037, %v1036
    %1054 = vmatpush.bf16.msra.mxu0 %v1045
    %1055 = vmatpush.bf16.msra.mxu0 %v1044
    %1056 = vmatpush.bf16.msra.mxu0 %v1043
    %1057 = vmatpush.bf16.msra.mxu0 %v1042
    %1058 = vmatpush.bf16.msra.mxu0 %v1041
    %1059 = vmatpush.bf16.msra.mxu0 %v1040
    %1060 = vmatpush.bf16.msra.mxu0 %v1039
    %1061 = vmatpush.bf16.msra.mxu0 %v1038
    %1062 = vmatmul.bf16.gmra.mxu0 %v1002
    %v1063 = vpop.f32.mrf.mxu0
    %v1064 = vadd.f32 %v1004, %v1063
    %v1065 = vpop.f32.mrf.mxu0
    %1066 = vdwg.mxu0
    %v1067 = vmax.f32 %v1064, 0.0
    %1068 = vst [vmem:[#allocation22] sm:$0xff] %v1067
    %v1069 = vld [vmem:[#allocation14] sm:$0xff]
    %v1070 = vld [vmem:[#allocation14 + $0x8] sm:$0xff]
    %v1071 = vld [vmem:[#allocation14 + $0x10] sm:$0xff]
    %v1072 = vld [vmem:[#allocation14 + $0x18] sm:$0xf]
    %v1073 = vld [vmem:[#allocation14 + $0x1c] sm:$0xff]
    %v1074 = vld [vmem:[#allocation14 + $0x24] sm:$0xff]
    %v1075 = vld [vmem:[#allocation14 + $0x2c] sm:$0xff]
    %v1076 = vld [vmem:[#allocation14 + $0x34] sm:$0xf]
    %v1077 = vld [vmem:[#allocation14 + $0x38] sm:$0xff]
    %v1078 = vld [vmem:[#allocation14 + $0x40] sm:$0xff]
    %v1079 = vld [vmem:[#allocation14 + $0x48] sm:$0xff]
    %v1080 = vld [vmem:[#allocation14 + $0x50] sm:$0xf]
    %v1081 = vld [vmem:[#allocation14 + $0x54] sm:$0xff]
    %v1082 = vld [vmem:[#allocation14 + $0x5c] sm:$0xff]
    %v1083 = vld [vmem:[#allocation14 + $0x64] sm:$0xff]
    %v1084 = vld [vmem:[#allocation14 + $0x6c] sm:$0xf]
    %v1085 = vld [vmem:[#allocation14 + $0x70] sm:$0xff]
    %v1086 = vld [vmem:[#allocation14 + $0x78] sm:$0xff]
    %v1087 = vld [vmem:[#allocation14 + $0x80] sm:$0xff]
    %v1088 = vld [vmem:[#allocation14 + $0x88] sm:$0xf]
    %v1089 = vld [vmem:[#allocation14 + $0x8c] sm:$0xff]
    %v1090 = vld [vmem:[#allocation14 + $0x94] sm:$0xff]
    %v1091 = vld [vmem:[#allocation14 + $0x9c] sm:$0xff]
    %v1092 = vld [vmem:[#allocation14 + $0xa4] sm:$0xf]
    %v1093 = vld [vmem:[#allocation14 + $0xa8] sm:$0xff]
    %v1094 = vld [vmem:[#allocation14 + $0xb0] sm:$0xff]
    %v1095 = vld [vmem:[#allocation14 + $0xb8] sm:$0xff]
    %v1096 = vld [vmem:[#allocation14 + $0xc0] sm:$0xf]
    %v1097 = vld [vmem:[#allocation14 + $0xc4] sm:$0xff]
    %v1098 = vld [vmem:[#allocation14 + $0xcc] sm:$0xff]
    %v1099 = vld [vmem:[#allocation14 + $0xd4] sm:$0xff]
    %v1100 = vld [vmem:[#allocation14 + $0xdc] sm:$0xf]
    %v1101 = vld [vmem:[#allocation14 + $0xe0] sm:$0xff]
    %v1102 = vld [vmem:[#allocation14 + $0xe8] sm:$0xff]
    %v1103 = vld [vmem:[#allocation14 + $0xf0] sm:$0xff]
    %v1104 = vld [vmem:[#allocation14 + $0xf8] sm:$0xf]
    %v1105 = vld [vmem:[#allocation14 + $0xfc] sm:$0xff]
    %v1106 = vld [vmem:[#allocation14 + $0x104] sm:$0xff]
    %v1107 = vld [vmem:[#allocation14 + $0x10c] sm:$0xff]
    %v1108 = vld [vmem:[#allocation14 + $0x114] sm:$0xf]
    %v1109 = vld [vmem:[#allocation14 + $0x118] sm:$0xff]
    %v1110 = vld [vmem:[#allocation14 + $0x120] sm:$0xff]
    %v1111 = vld [vmem:[#allocation14 + $0x128] sm:$0xff]
    %v1112 = vld [vmem:[#allocation14 + $0x130] sm:$0xf]
    %v1113 = vld [vmem:[#allocation14 + $0x134] sm:$0xff]
    %v1114 = vld [vmem:[#allocation14 + $0x13c] sm:$0xff]
    %v1115 = vld [vmem:[#allocation14 + $0x144] sm:$0xff]
    %v1116 = vld [vmem:[#allocation14 + $0x14c] sm:$0xf]
    %v1117 = vld [vmem:[#allocation14 + $0x150] sm:$0xff]
    %v1118 = vld [vmem:[#allocation14 + $0x158] sm:$0xff]
    %v1119 = vld [vmem:[#allocation14 + $0x160] sm:$0xff]
    %v1120 = vld [vmem:[#allocation14 + $0x168] sm:$0xf]
    %v1121 = vld [vmem:[#allocation14 + $0x16c] sm:$0xff]
    %v1122 = vld [vmem:[#allocation14 + $0x174] sm:$0xff]
    %v1123 = vld [vmem:[#allocation14 + $0x17c] sm:$0xff]
    %v1124 = vld [vmem:[#allocation14 + $0x184] sm:$0xf]
    %v1125 = vld [vmem:[#allocation14 + $0x188] sm:$0xff]
    %v1126 = vld [vmem:[#allocation14 + $0x190] sm:$0xff]
    %v1127 = vld [vmem:[#allocation14 + $0x198] sm:$0xff]
    %v1128 = vld [vmem:[#allocation14 + $0x1a0] sm:$0xf]
    %v1129 = vld [vmem:[#allocation14 + $0x1a4] sm:$0xff]
    %v1130 = vld [vmem:[#allocation14 + $0x1ac] sm:$0xff]
    %v1131 = vld [vmem:[#allocation14 + $0x1b4] sm:$0xff]
    %v1132 = vld [vmem:[#allocation14 + $0x1bc] sm:$0xf]
    %v1133 = vld [vmem:[%s12] sm:$0xff]
    %v1134 = vpack.c.bf16 %v1067, %v1067
    %v1136 = vperm.slane %v1133, 0
    %v1137 = vperm.slane %v1133, 1
    %v1138 = vperm.slane %v1133, 2
    %v1139 = vperm.slane %v1133, 3
    %v1140 = vperm.slane %v1133, 4
    %v1141 = vperm.slane %v1133, 5
    %v1142 = vperm.slane %v1133, 6
    %v1214 = vunpack.c.l.b16 %v1069
    %v1215 = vunpack.c.h.b16 %v1069
    %v1216 = vunpack.c.l.b16 %v1070
    %v1217 = vunpack.c.h.b16 %v1070
    %v1218 = vunpack.c.l.b16 %v1071
    %v1219 = vunpack.c.h.b16 %v1071
    %v1220 = vunpack.c.l.b16 %v1072
    %v1221 = vunpack.c.l.b16 %v1073
    %v1222 = vunpack.c.h.b16 %v1073
    %v1223 = vunpack.c.l.b16 %v1074
    %v1224 = vunpack.c.h.b16 %v1074
    %v1225 = vunpack.c.l.b16 %v1075
    %v1226 = vunpack.c.h.b16 %v1075
    %v1227 = vunpack.c.l.b16 %v1076
    %v1228 = vunpack.c.l.b16 %v1077
    %v1229 = vunpack.c.h.b16 %v1077
    %v1230 = vunpack.c.l.b16 %v1078
    %v1231 = vunpack.c.h.b16 %v1078
    %v1232 = vunpack.c.l.b16 %v1079
    %v1233 = vunpack.c.h.b16 %v1079
    %v1234 = vunpack.c.l.b16 %v1080
    %v1235 = vunpack.c.l.b16 %v1081
    %v1236 = vunpack.c.h.b16 %v1081
    %v1237 = vunpack.c.l.b16 %v1082
    %v1238 = vunpack.c.h.b16 %v1082
    %v1239 = vunpack.c.l.b16 %v1083
    %v1240 = vunpack.c.h.b16 %v1083
    %v1241 = vunpack.c.l.b16 %v1084
    %v1242 = vunpack.c.l.b16 %v1085
    %v1243 = vunpack.c.h.b16 %v1085
    %v1244 = vunpack.c.l.b16 %v1086
    %v1245 = vunpack.c.h.b16 %v1086
    %v1246 = vunpack.c.l.b16 %v1087
    %v1247 = vunpack.c.h.b16 %v1087
    %v1248 = vunpack.c.l.b16 %v1088
    %v1249 = vunpack.c.l.b16 %v1089
    %v1250 = vunpack.c.h.b16 %v1089
    %v1251 = vunpack.c.l.b16 %v1090
    %v1252 = vunpack.c.h.b16 %v1090
    %v1253 = vunpack.c.l.b16 %v1091
    %v1254 = vunpack.c.h.b16 %v1091
    %v1255 = vunpack.c.l.b16 %v1092
    %v1256 = vunpack.c.l.b16 %v1093
    %v1257 = vunpack.c.h.b16 %v1093
    %v1258 = vunpack.c.l.b16 %v1094
    %v1259 = vunpack.c.h.b16 %v1094
    %v1260 = vunpack.c.l.b16 %v1095
    %v1261 = vunpack.c.h.b16 %v1095
    %v1262 = vunpack.c.l.b16 %v1096
    %v1263 = vunpack.c.l.b16 %v1097
    %v1264 = vunpack.c.h.b16 %v1097
    %v1265 = vunpack.c.l.b16 %v1098
    %v1266 = vunpack.c.h.b16 %v1098
    %v1267 = vunpack.c.l.b16 %v1099
    %v1268 = vunpack.c.h.b16 %v1099
    %v1269 = vunpack.c.l.b16 %v1100
    %v1270 = vunpack.c.l.b16 %v1101
    %v1271 = vunpack.c.h.b16 %v1101
    %v1272 = vunpack.c.l.b16 %v1102
    %v1273 = vunpack.c.h.b16 %v1102
    %v1274 = vunpack.c.l.b16 %v1103
    %v1275 = vunpack.c.h.b16 %v1103
    %v1276 = vunpack.c.l.b16 %v1104
    %v1277 = vunpack.c.l.b16 %v1105
    %v1278 = vunpack.c.h.b16 %v1105
    %v1279 = vunpack.c.l.b16 %v1106
    %v1280 = vunpack.c.h.b16 %v1106
    %v1281 = vunpack.c.l.b16 %v1107
    %v1282 = vunpack.c.h.b16 %v1107
    %v1283 = vunpack.c.l.b16 %v1108
    %v1284 = vunpack.c.l.b16 %v1109
    %v1285 = vunpack.c.h.b16 %v1109
    %v1286 = vunpack.c.l.b16 %v1110
    %v1287 = vunpack.c.h.b16 %v1110
    %v1288 = vunpack.c.l.b16 %v1111
    %v1289 = vunpack.c.h.b16 %v1111
    %v1290 = vunpack.c.l.b16 %v1112
    %v1291 = vunpack.c.l.b16 %v1113
    %v1292 = vunpack.c.h.b16 %v1113
    %v1293 = vunpack.c.l.b16 %v1114
    %v1294 = vunpack.c.h.b16 %v1114
    %v1295 = vunpack.c.l.b16 %v1115
    %v1296 = vunpack.c.h.b16 %v1115
    %v1297 = vunpack.c.l.b16 %v1116
    %v1298 = vunpack.c.l.b16 %v1117
    %v1299 = vunpack.c.h.b16 %v1117
    %v1300 = vunpack.c.l.b16 %v1118
    %v1301 = vunpack.c.h.b16 %v1118
    %v1302 = vunpack.c.l.b16 %v1119
    %v1303 = vunpack.c.h.b16 %v1119
    %v1304 = vunpack.c.l.b16 %v1120
    %v1305 = vunpack.c.l.b16 %v1121
    %v1306 = vunpack.c.h.b16 %v1121
    %v1307 = vunpack.c.l.b16 %v1122
    %v1308 = vunpack.c.h.b16 %v1122
    %v1309 = vunpack.c.l.b16 %v1123
    %v1310 = vunpack.c.h.b16 %v1123
    %v1311 = vunpack.c.l.b16 %v1124
    %v1312 = vunpack.c.l.b16 %v1125
    %v1313 = vunpack.c.h.b16 %v1125
    %v1314 = vunpack.c.l.b16 %v1126
    %v1315 = vunpack.c.h.b16 %v1126
    %v1316 = vunpack.c.l.b16 %v1127
    %v1317 = vunpack.c.h.b16 %v1127
    %v1318 = vunpack.c.l.b16 %v1128
    %v1319 = vunpack.c.l.b16 %v1129
    %v1320 = vunpack.c.h.b16 %v1129
    %v1321 = vunpack.c.l.b16 %v1130
    %v1322 = vunpack.c.h.b16 %v1130
    %v1323 = vunpack.c.l.b16 %v1131
    %v1324 = vunpack.c.h.b16 %v1131
    %v1325 = vunpack.c.l.b16 %v1132
    %v1326 = vpack.c.b16 %v1221, %v1214
    %v1327 = vpack.c.b16 %v1222, %v1215
    %v1328 = vpack.c.b16 %v1223, %v1216
    %v1329 = vpack.c.b16 %v1224, %v1217
    %v1330 = vpack.c.b16 %v1225, %v1218
    %v1331 = vpack.c.b16 %v1226, %v1219
    %v1332 = vpack.c.b16 %v1227, %v1220
    %v1333 = vpack.c.b16 %v1235, %v1228
    %v1334 = vpack.c.b16 %v1236, %v1229
    %v1335 = vpack.c.b16 %v1237, %v1230
    %v1336 = vpack.c.b16 %v1238, %v1231
    %v1337 = vpack.c.b16 %v1239, %v1232
    %v1338 = vpack.c.b16 %v1240, %v1233
    %v1339 = vpack.c.b16 %v1241, %v1234
    %v1340 = vpack.c.b16 %v1249, %v1242
    %v1341 = vpack.c.b16 %v1250, %v1243
    %v1342 = vpack.c.b16 %v1251, %v1244
    %v1343 = vpack.c.b16 %v1252, %v1245
    %v1344 = vpack.c.b16 %v1253, %v1246
    %v1345 = vpack.c.b16 %v1254, %v1247
    %v1346 = vpack.c.b16 %v1255, %v1248
    %v1347 = vpack.c.b16 %v1263, %v1256
    %v1348 = vpack.c.b16 %v1264, %v1257
    %v1349 = vpack.c.b16 %v1265, %v1258
    %v1350 = vpack.c.b16 %v1266, %v1259
    %v1351 = vpack.c.b16 %v1267, %v1260
    %v1352 = vpack.c.b16 %v1268, %v1261
    %v1353 = vpack.c.b16 %v1269, %v1262
    %v1354 = vpack.c.b16 %v1277, %v1270
    %v1355 = vpack.c.b16 %v1278, %v1271
    %v1356 = vpack.c.b16 %v1279, %v1272
    %v1357 = vpack.c.b16 %v1280, %v1273
    %v1358 = vpack.c.b16 %v1281, %v1274
    %v1359 = vpack.c.b16 %v1282, %v1275
    %v1360 = vpack.c.b16 %v1283, %v1276
    %v1361 = vpack.c.b16 %v1291, %v1284
    %v1362 = vpack.c.b16 %v1292, %v1285
    %v1363 = vpack.c.b16 %v1293, %v1286
    %v1364 = vpack.c.b16 %v1294, %v1287
    %v1365 = vpack.c.b16 %v1295, %v1288
    %v1366 = vpack.c.b16 %v1296, %v1289
    %v1367 = vpack.c.b16 %v1297, %v1290
    %v1368 = vpack.c.b16 %v1305, %v1298
    %v1369 = vpack.c.b16 %v1306, %v1299
    %v1370 = vpack.c.b16 %v1307, %v1300
    %v1371 = vpack.c.b16 %v1308, %v1301
    %v1372 = vpack.c.b16 %v1309, %v1302
    %v1373 = vpack.c.b16 %v1310, %v1303
    %v1374 = vpack.c.b16 %v1311, %v1304
    %v1375 = vpack.c.b16 %v1319, %v1312
    %v1376 = vpack.c.b16 %v1320, %v1313
    %v1377 = vpack.c.b16 %v1321, %v1314
    %v1378 = vpack.c.b16 %v1322, %v1315
    %v1379 = vpack.c.b16 %v1323, %v1316
    %v1380 = vpack.c.b16 %v1324, %v1317
    %v1381 = vpack.c.b16 %v1325, %v1318
    %1438 = vmatpush.bf16.msra.mxu0 %v1375
    %1439 = vmatpush.bf16.msra.mxu0 %v1368
    %1440 = vmatpush.bf16.msra.mxu0 %v1361
    %1441 = vmatpush.bf16.msra.mxu0 %v1354
    %1442 = vmatpush.bf16.msra.mxu0 %v1347
    %1443 = vmatpush.bf16.msra.mxu0 %v1340
    %1444 = vmatpush.bf16.msra.mxu0 %v1333
    %1445 = vmatpush.bf16.msra.mxu0 %v1326
    %1446 = vmatmul.bf16.gmra.mxu0 %v1134
    %v1447 = vpop.f32.mrf.mxu0
    %v1448 = vadd.f32 %v1136, %v1447
    %v1449 = vpop.f32.mrf.mxu0
    %1450 = vdwg.mxu0
    %1451 = vmatpush.bf16.msra.mxu0 %v1376
    %1452 = vmatpush.bf16.msra.mxu0 %v1369
    %1453 = vmatpush.bf16.msra.mxu0 %v1362
    %1454 = vmatpush.bf16.msra.mxu0 %v1355
    %1455 = vmatpush.bf16.msra.mxu0 %v1348
    %1456 = vmatpush.bf16.msra.mxu0 %v1341
    %1457 = vmatpush.bf16.msra.mxu0 %v1334
    %1458 = vmatpush.bf16.msra.mxu0 %v1327
    %1459 = vmatmul.bf16.gmra.mxu0 %v1134
    %v1460 = vpop.f32.mrf.mxu0
    %v1461 = vadd.f32 %v1137, %v1460
    %v1462 = vpop.f32.mrf.mxu0
    %1463 = vdwg.mxu0
    %1464 = vmatpush.bf16.msra.mxu0 %v1377
    %1465 = vmatpush.bf16.msra.mxu0 %v1370
    %1466 = vmatpush.bf16.msra.mxu0 %v1363
    %1467 = vmatpush.bf16.msra.mxu0 %v1356
    %1468 = vmatpush.bf16.msra.mxu0 %v1349
    %1469 = vmatpush.bf16.msra.mxu0 %v1342
    %1470 = vmatpush.bf16.msra.mxu0 %v1335
    %1471 = vmatpush.bf16.msra.mxu0 %v1328
    %1472 = vmatmul.bf16.gmra.mxu0 %v1134
    %v1473 = vpop.f32.mrf.mxu0
    %v1474 = vadd.f32 %v1138, %v1473
    %v1475 = vpop.f32.mrf.mxu0
    %1476 = vdwg.mxu0
    %1477 = vmatpush.bf16.msra.mxu0 %v1378
    %1478 = vmatpush.bf16.msra.mxu0 %v1371
    %1479 = vmatpush.bf16.msra.mxu0 %v1364
    %1480 = vmatpush.bf16.msra.mxu0 %v1357
    %1481 = vmatpush.bf16.msra.mxu0 %v1350
    %1482 = vmatpush.bf16.msra.mxu0 %v1343
    %1483 = vmatpush.bf16.msra.mxu0 %v1336
    %1484 = vmatpush.bf16.msra.mxu0 %v1329
    %1485 = vmatmul.bf16.gmra.mxu0 %v1134
    %v1486 = vpop.f32.mrf.mxu0
    %v1487 = vadd.f32 %v1139, %v1486
    %v1488 = vpop.f32.mrf.mxu0
    %1489 = vdwg.mxu0
    %1490 = vmatpush.bf16.msra.mxu0 %v1379
    %1491 = vmatpush.bf16.msra.mxu0 %v1372
    %1492 = vmatpush.bf16.msra.mxu0 %v1365
    %1493 = vmatpush.bf16.msra.mxu0 %v1358
    %1494 = vmatpush.bf16.msra.mxu0 %v1351
    %1495 = vmatpush.bf16.msra.mxu0 %v1344
    %1496 = vmatpush.bf16.msra.mxu0 %v1337
    %1497 = vmatpush.bf16.msra.mxu0 %v1330
    %1498 = vmatmul.bf16.gmra.mxu0 %v1134
    %v1499 = vpop.f32.mrf.mxu0
    %v1500 = vadd.f32 %v1140, %v1499
    %v1501 = vpop.f32.mrf.mxu0
    %1502 = vdwg.mxu0
    %1503 = vmatpush.bf16.msra.mxu0 %v1380
    %1504 = vmatpush.bf16.msra.mxu0 %v1373
    %1505 = vmatpush.bf16.msra.mxu0 %v1366
    %1506 = vmatpush.bf16.msra.mxu0 %v1359
    %1507 = vmatpush.bf16.msra.mxu0 %v1352
    %1508 = vmatpush.bf16.msra.mxu0 %v1345
    %1509 = vmatpush.bf16.msra.mxu0 %v1338
    %1510 = vmatpush.bf16.msra.mxu0 %v1331
    %1511 = vmatmul.bf16.gmra.mxu0 %v1134
    %v1512 = vpop.f32.mrf.mxu0
    %v1513 = vadd.f32 %v1141, %v1512
    %v1514 = vpop.f32.mrf.mxu0
    %1515 = vdwg.mxu0
    %1516 = vmatpush.bf16.msra.mxu0 %v1381
    %1517 = vmatpush.bf16.msra.mxu0 %v1374
    %1518 = vmatpush.bf16.msra.mxu0 %v1367
    %1519 = vmatpush.bf16.msra.mxu0 %v1360
    %1520 = vmatpush.bf16.msra.mxu0 %v1353
    %1521 = vmatpush.bf16.msra.mxu0 %v1346
    %1522 = vmatpush.bf16.msra.mxu0 %v1339
    %1523 = vmatpush.bf16.msra.mxu0 %v1332
    %1524 = vmatmul.bf16.gmra.mxu0 %v1134
    %v1525 = vpop.f32.mrf.mxu0
    %v1526 = vadd.f32 %v1142, %v1525
    %v1527 = vpop.f32.mrf.mxu0
    %1528 = vdwg.mxu0
    %v1529 = vsub.f32 0.0, %v1448
    %v1530 = vsub.f32 0.0, %v1461
    %v1531 = vsub.f32 0.0, %v1474
    %v1532 = vsub.f32 0.0, %v1487
    %v1533 = vsub.f32 0.0, %v1500
    %v1534 = vsub.f32 0.0, %v1513
    %v1535 = vsub.f32 0.0, %v1526
    %v1536 = vmul.f32 %v1529, 1.442695
    %v1537 = vpow.pop %v1536
    %v1538 = vmul.f32 %v1530, 1.442695
    %v1539 = vpow.pop %v1538
    %v1540 = vmul.f32 %v1531, 1.442695
    %v1541 = vpow.pop %v1540
    %v1542 = vmul.f32 %v1532, 1.442695
    %v1543 = vpow.pop %v1542
    %v1544 = vmul.f32 %v1533, 1.442695
    %v1545 = vpow.pop %v1544
    %v1546 = vmul.f32 %v1534, 1.442695
    %v1547 = vpow.pop %v1546
    %v1548 = vmul.f32 %v1535, 1.442695
    %v1549 = vpow.pop %v1548
    %v1550 = vadd.f32 %v1537, 1.0
    %v1551 = vadd.f32 %v1539, 1.0
    %v1552 = vadd.f32 %v1541, 1.0
    %v1553 = vadd.f32 %v1543, 1.0
    %v1554 = vadd.f32 %v1545, 1.0
    %v1555 = vadd.f32 %v1547, 1.0
    %v1556 = vadd.f32 %v1549, 1.0
    %v1557 = vrcp.pop %v1550
    %v1558 = vmul.f32 %v1550, %v1557
    %v1559 = vsub.f32 1.0, %v1558
    %v1560 = vmul.f32 %v1557, %v1559
    %v1561 = vadd.f32 %v1557, %v1560
    %vm1562 = vweird.f32 %v1550
    %vm1563 = vweird.f32 %v1557
    %vm1564 = vmor %vm1562, %vm1563
    %v1565 = vsel %vm1564, %v1557, %v1561
    %v1566 = vand.u32 2147483647, %v1550
    %vm1567 = vcmp.eq.f32.partialorder %v1566, 8.507059e+37
    %v1568 = vand.u32 %v1550, 2147483648
    %v1569 = vor.u32 1.1754944e-38, %v1568
    %v1570 = vsel %vm1567, %v1569, %v1565
    %v1571 = vmul.f32 1.0, %v1570
    %v1572 = vrcp.pop %v1551
    %v1573 = vmul.f32 %v1551, %v1572
    %v1574 = vsub.f32 1.0, %v1573
    %v1575 = vmul.f32 %v1572, %v1574
    %v1576 = vadd.f32 %v1572, %v1575
    %vm1577 = vweird.f32 %v1551
    %vm1578 = vweird.f32 %v1572
    %vm1579 = vmor %vm1577, %vm1578
    %v1580 = vsel %vm1579, %v1572, %v1576
    %v1581 = vand.u32 2147483647, %v1551
    %vm1582 = vcmp.eq.f32.partialorder %v1581, 8.507059e+37
    %v1583 = vand.u32 %v1551, 2147483648
    %v1584 = vor.u32 1.1754944e-38, %v1583
    %v1585 = vsel %vm1582, %v1584, %v1580
    %v1586 = vmul.f32 1.0, %v1585
    %v1587 = vrcp.pop %v1552
    %v1588 = vmul.f32 %v1552, %v1587
    %v1589 = vsub.f32 1.0, %v1588
    %v1590 = vmul.f32 %v1587, %v1589
    %v1591 = vadd.f32 %v1587, %v1590
    %vm1592 = vweird.f32 %v1552
    %vm1593 = vweird.f32 %v1587
    %vm1594 = vmor %vm1592, %vm1593
    %v1595 = vsel %vm1594, %v1587, %v1591
    %v1596 = vand.u32 2147483647, %v1552
    %vm1597 = vcmp.eq.f32.partialorder %v1596, 8.507059e+37
    %v1598 = vand.u32 %v1552, 2147483648
    %v1599 = vor.u32 1.1754944e-38, %v1598
    %v1600 = vsel %vm1597, %v1599, %v1595
    %v1601 = vmul.f32 1.0, %v1600
    %v1602 = vrcp.pop %v1553
    %v1603 = vmul.f32 %v1553, %v1602
    %v1604 = vsub.f32 1.0, %v1603
    %v1605 = vmul.f32 %v1602, %v1604
    %v1606 = vadd.f32 %v1602, %v1605
    %vm1607 = vweird.f32 %v1553
    %vm1608 = vweird.f32 %v1602
    %vm1609 = vmor %vm1607, %vm1608
    %v1610 = vsel %vm1609, %v1602, %v1606
    %v1611 = vand.u32 2147483647, %v1553
    %vm1612 = vcmp.eq.f32.partialorder %v1611, 8.507059e+37
    %v1613 = vand.u32 %v1553, 2147483648
    %v1614 = vor.u32 1.1754944e-38, %v1613
    %v1615 = vsel %vm1612, %v1614, %v1610
    %v1616 = vmul.f32 1.0, %v1615
    %v1617 = vrcp.pop %v1554
    %v1618 = vmul.f32 %v1554, %v1617
    %v1619 = vsub.f32 1.0, %v1618
    %v1620 = vmul.f32 %v1617, %v1619
    %v1621 = vadd.f32 %v1617, %v1620
    %vm1622 = vweird.f32 %v1554
    %vm1623 = vweird.f32 %v1617
    %vm1624 = vmor %vm1622, %vm1623
    %v1625 = vsel %vm1624, %v1617, %v1621
    %v1626 = vand.u32 2147483647, %v1554
    %vm1627 = vcmp.eq.f32.partialorder %v1626, 8.507059e+37
    %v1628 = vand.u32 %v1554, 2147483648
    %v1629 = vor.u32 1.1754944e-38, %v1628
    %v1630 = vsel %vm1627, %v1629, %v1625
    %v1631 = vmul.f32 1.0, %v1630
    %v1632 = vrcp.pop %v1555
    %v1633 = vmul.f32 %v1555, %v1632
    %v1634 = vsub.f32 1.0, %v1633
    %v1635 = vmul.f32 %v1632, %v1634
    %v1636 = vadd.f32 %v1632, %v1635
    %vm1637 = vweird.f32 %v1555
    %vm1638 = vweird.f32 %v1632
    %vm1639 = vmor %vm1637, %vm1638
    %v1640 = vsel %vm1639, %v1632, %v1636
    %v1641 = vand.u32 2147483647, %v1555
    %vm1642 = vcmp.eq.f32.partialorder %v1641, 8.507059e+37
    %v1643 = vand.u32 %v1555, 2147483648
    %v1644 = vor.u32 1.1754944e-38, %v1643
    %v1645 = vsel %vm1642, %v1644, %v1640
    %v1646 = vmul.f32 1.0, %v1645
    %v1647 = vrcp.pop %v1556
    %v1648 = vmul.f32 %v1556, %v1647
    %v1649 = vsub.f32 1.0, %v1648
    %v1650 = vmul.f32 %v1647, %v1649
    %v1651 = vadd.f32 %v1647, %v1650
    %vm1652 = vweird.f32 %v1556
    %vm1653 = vweird.f32 %v1647
    %vm1654 = vmor %vm1652, %vm1653
    %v1655 = vsel %vm1654, %v1647, %v1651
    %v1656 = vand.u32 2147483647, %v1556
    %vm1657 = vcmp.eq.f32.partialorder %v1656, 8.507059e+37
    %v1658 = vand.u32 %v1556, 2147483648
    %v1659 = vor.u32 1.1754944e-38, %v1658
    %v1660 = vsel %vm1657, %v1659, %v1655
    %v1661 = vmul.f32 1.0, %v1660
    %1662 = vst [vmem:[#allocation23] sm:$0xff] %v1571
    %1663 = vst [vmem:[#allocation23 + $0x8] sm:$0xff] %v1586
    %1664 = vst [vmem:[#allocation23 + $0x10] sm:$0xff] %v1601
    %1665 = vst [vmem:[#allocation23 + $0x18] sm:$0xff] %v1616
    %1666 = vst [vmem:[#allocation23 + $0x20] sm:$0xff] %v1631
    %1667 = vst [vmem:[#allocation23 + $0x28] sm:$0xff] %v1646
    %1668 = vst [vmem:[#allocation23 + $0x30] sm:$0xff] %v1661
    // Predicated region
    $region86: #{tpu_custom_call.1} parent=1 // pred_check
      _
    $region87: #{tpu_custom_call.1} parent=1 // pred_check_branch
      %1670 = sbr.rel (0) target = $region89
    $region88: #{tpu_custom_call.1} parent=1 // pred_region
      %1672 = vsyncadd [#allocation4], 0
      %s1674 = sshll.u32 [#allocation16], 4
      %s1675 = int_to_ptr.vmem [resolvable:$true] %s1674
      %s1676 = sshll.u32 %s13, 4
      %s1677 = int_to_ptr.hbm [resolvable:$true] %s1676
      %1679 = dma.vmem_to_hbm [thread:$0]  %s1675, 128, %s1677, [#allocation4]
    $region89: #{tpu_custom_call.1} parent=1 // pred_fallthru
      _
    // Predicated region
    $region90: #{tpu_custom_call.1} parent=1 // pred_check
      _
    $region91: #{tpu_custom_call.1} parent=1 // pred_check_branch
      %1681 = sbr.rel (0) target = $region93
    $region92: #{tpu_custom_call.1} parent=1 // pred_region
      %1683 = vsyncadd [#allocation18], 0
      %s1685 = sshll.u32 [#allocation17], 4
      %s1686 = int_to_ptr.vmem [resolvable:$true] %s1685
      %s1687 = sshll.u32 %s14, 4
      %s1688 = int_to_ptr.hbm [resolvable:$true] %s1687
      %1690 = dma.vmem_to_hbm [thread:$0]  %s1686, 128, %s1688, [#allocation18]
    $region93: #{tpu_custom_call.1} parent=1 // pred_fallthru
      _
    // Predicated region
    $region94: #{tpu_custom_call.1} parent=1 // pred_check
      _
    $region95: #{tpu_custom_call.1} parent=1 // pred_check_branch
      %1692 = sbr.rel (0) target = $region97
    $region96: #{tpu_custom_call.1} parent=1 // pred_region
      %1694 = vsyncadd [#allocation18], 0
      %s1696 = sshll.u32 [#allocation19], 4
      %s1697 = int_to_ptr.vmem [resolvable:$true] %s1696
      %s1698 = sshll.u32 %s15, 4
      %s1699 = int_to_ptr.hbm [resolvable:$true] %s1698
      %1701 = dma.vmem_to_hbm [thread:$0]  %s1697, 128, %s1699, [#allocation18]
    $region97: #{tpu_custom_call.1} parent=1 // pred_fallthru
      _
    // Predicated region
    $region98: #{tpu_custom_call.1} parent=1 // pred_check
      _
    $region99: #{tpu_custom_call.1} parent=1 // pred_check_branch
      %1703 = sbr.rel (0) target = $region101
    $region100: #{tpu_custom_call.1} parent=1 // pred_region
      %1705 = vsyncadd [#allocation21], 0
      %s1707 = sshll.u32 [#allocation20], 4
      %s1708 = int_to_ptr.vmem [resolvable:$true] %s1707
      %s1709 = sshll.u32 %s16, 4
      %s1710 = int_to_ptr.hbm [resolvable:$true] %s1709
      %1712 = dma.vmem_to_hbm [thread:$0]  %s1708, 128, %s1710, [#allocation21]
    $region101: #{tpu_custom_call.1} parent=1 // pred_fallthru
      _
    // Predicated region
    $region102: #{tpu_custom_call.1} parent=1 // pred_check
      _
    $region103: #{tpu_custom_call.1} parent=1 // pred_check_branch
      %1714 = sbr.rel (0) target = $region105
    $region104: #{tpu_custom_call.1} parent=1 // pred_region
      %1716 = vsyncadd [#allocation21], 0
      %s1718 = sshll.u32 [#allocation22], 4
      %s1719 = int_to_ptr.vmem [resolvable:$true] %s1718
      %s1720 = sshll.u32 %s17, 4
      %s1721 = int_to_ptr.hbm [resolvable:$true] %s1720
      %1723 = dma.vmem_to_hbm [thread:$0]  %s1719, 128, %s1721, [#allocation21]
    $region105: #{tpu_custom_call.1} parent=1 // pred_fallthru
      _
    // Predicated region
    $region106: #{tpu_custom_call.1} parent=1 // pred_check
      _
    $region107: #{tpu_custom_call.1} parent=1 // pred_check_branch
      %1725 = sbr.rel (0) target = $region109
    $region108: #{tpu_custom_call.1} parent=1 // pred_region
      %1727 = vsyncadd [#allocation24], 0
      %s1729 = sshll.u32 [#allocation23], 4
      %s1730 = int_to_ptr.vmem [resolvable:$true] %s1729
      %s1731 = sshll.u32 %s18, 4
      %s1732 = int_to_ptr.hbm [resolvable:$true] %s1731
      %1734 = dma.vmem_to_hbm [thread:$0]  %s1730, 896, %s1732, [#allocation24]
    $region109: #{tpu_custom_call.1} parent=1 // pred_fallthru
      _
    // Predicated region
    $region110: #{tpu_custom_call.1} parent=1 // pred_check
      _
    $region111: #{tpu_custom_call.1} parent=1 // pred_check_branch
      %1736 = sbr.rel (0) target = $region113
    $region112: #{tpu_custom_call.1} parent=1 // pred_region
      %1738 = dma.done [#allocation4], 128
    $region113: #{tpu_custom_call.1} parent=1 // pred_fallthru
      _
    // Predicated region
    $region114: #{tpu_custom_call.1} parent=1 // pred_check
      _
    $region115: #{tpu_custom_call.1} parent=1 // pred_check_branch
      %1740 = sbr.rel (0) target = $region117
    $region116: #{tpu_custom_call.1} parent=1 // pred_region
      %1742 = dma.done [#allocation18], 128
    $region117: #{tpu_custom_call.1} parent=1 // pred_fallthru
      _
    // Predicated region
    $region118: #{tpu_custom_call.1} parent=1 // pred_check
      _
    $region119: #{tpu_custom_call.1} parent=1 // pred_check_branch
      %1744 = sbr.rel (0) target = $region121
    $region120: #{tpu_custom_call.1} parent=1 // pred_region
      %1746 = dma.done [#allocation18], 128
    $region121: #{tpu_custom_call.1} parent=1 // pred_fallthru
      _
    // Predicated region
    $region122: #{tpu_custom_call.1} parent=1 // pred_check
      _
    $region123: #{tpu_custom_call.1} parent=1 // pred_check_branch
      %1748 = sbr.rel (0) target = $region125
    $region124: #{tpu_custom_call.1} parent=1 // pred_region
      %1750 = dma.done [#allocation21], 128
    $region125: #{tpu_custom_call.1} parent=1 // pred_fallthru
      _
    // Predicated region
    $region126: #{tpu_custom_call.1} parent=1 // pred_check
      _
    $region127: #{tpu_custom_call.1} parent=1 // pred_check_branch
      %1752 = sbr.rel (0) target = $region129
    $region128: #{tpu_custom_call.1} parent=1 // pred_region
      %1754 = dma.done [#allocation21], 128
    $region129: #{tpu_custom_call.1} parent=1 // pred_fallthru
      _
    // Predicated region
    $region130: #{tpu_custom_call.1} parent=1 // pred_check
      _
    $region131: #{tpu_custom_call.1} parent=1 // pred_check_branch
      %1756 = sbr.rel (0) target = $region133
    $region132: #{tpu_custom_call.1} parent=1 // pred_region
      %1758 = dma.done [#allocation24], 896
    $region133: #{tpu_custom_call.1} parent=1 // pred_fallthru
      _
    %1759 = vsyncpa [#allocation3], 1
    %1760 = vsyncpa [#allocation6], 1
    %1761 = vsyncpa [#allocation9], 1
    %1762 = vsyncpa [#allocation12], 1
    %1763 = vsyncpa [#allocation15], 1
    %1764 = vsyncpa [#allocation4], 1
    %1765 = vsyncpa [#allocation18], 1
    %1766 = vsyncpa [#allocation21], 1
    %1767 = vsyncpa [#allocation24], 1

</llo_original>
